<compile_context>
chip_gen: v6e
topology: v6e:2x2x1
jax: 0.10.0
libtpu: 0.0.40
codegen_flags: <defaults>
</compile_context>

<pallas_src>
import math

import jax
import jax.numpy as jnp
from jax.experimental import pallas as pl
from jax.experimental.pallas import tpu as pltpu

MARGIN = 1.0
EPS_DIST = 1e-4   # eps added inside distance_matrix_vector (before sqrt)
EPS_LOSS = 1e-8   # self.eps added after sqrt
MASK_THRESH = 0.008


def _round_up(x, m):
    return ((x + m - 1) // m) * m


def _choose_tiles(n):
    """Pick (n_pad, tm, tn).  Modest tiles keep live VMEM small on every TPU
    generation (v5e 16 MiB scoped default, v7x 64 MiB physical) while staying
    large enough to amortize per-grid-step overhead."""
    if n <= 512:
        n_pad = _round_up(n, 128)
        return n_pad, n_pad, n_pad          # single tile
    tm, tn = 256, 512
    n_pad = _round_up(n, 512)               # lcm(tm, tn)
    return n_pad, tm, tn


def _make_loss_hardnet_kernel(n_valid, tm, tn):
    # sqrt(m) + EPS_LOSS < 0.008  <=>  m < (0.008 - EPS_LOSS)^2  (sqrt monotone).
    # Note: with EPS_DIST = 1e-4 added, m >= 1e-4 > thresh_sq for well-formed
    # inputs, so this class is practically empty -- kept for exact semantics.
    thresh_sq = (MASK_THRESH - EPS_LOSS) ** 2

    def kernel(a_ref, pcol_ref, prow_ref, out_ref, min0_ref, min1_ref, pos_ref):
        i = pl.program_id(0)          # row tile
        j = pl.program_id(1)          # column tile (reduction axis, innermost)
        nj = pl.num_programs(1)

        a = a_ref[...].astype(jnp.float32)      # (tm, d) resident anchor rows
        p = pcol_ref[...].astype(jnp.float32)   # (tn, d) streamed positive rows
        dim = a.shape[1]

        # Squared pairwise distances for this (tm, tn) tile.
        a_sq = jnp.sum(a * a, axis=1, keepdims=True)                       # (tm, 1)
        # Column squared norms laid out along lanes via a skinny MXU matmul
        # (avoids an in-kernel transpose / XLU relayout).
        ones_row = jnp.ones((1, dim), jnp.float32)
        p_sq = jax.lax.dot_general(
            ones_row, p * p,
            dimension_numbers=(((1,), (1,)), ((), ())),
            preferred_element_type=jnp.float32)                            # (1, tn)
        # a @ p.T without transposing p: contract last axis of both on the MXU.
        cross = jax.lax.dot_general(
            a, p,
            dimension_numbers=(((1,), (1,)), ((), ())),
            preferred_element_type=jnp.float32)                            # (tm, tn)
        m = a_sq + p_sq - 2.0 * cross + EPS_DIST                           # squared dist

        # Tile-local global indices (only tile-sized iotas, never N x N).
        row_g = i * tm + jax.lax.broadcasted_iota(jnp.int32, (tm, tn), 0)
        col_g = j * tn + jax.lax.broadcasted_iota(jnp.int32, (tm, tn), 1)
        is_diag = row_g == col_g
        col_valid = col_g < n_valid          # mask padded columns

        # Class 1 = entries that receive +10 after sqrt (diagonal or "too close").
        plus10 = jnp.logical_or(is_diag, m < thresh_sq)
        inf = jnp.float32(jnp.inf)
        part0 = jnp.min(
            jnp.where(jnp.logical_and(col_valid, jnp.logical_not(plus10)), m, inf),
            axis=1, keepdims=True)                                         # (tm, 1)
        part1 = jnp.min(
            jnp.where(jnp.logical_and(col_valid, plus10), m, inf),
            axis=1, keepdims=True)                                         # (tm, 1)

        @pl.when(j == 0)
        def _init():
            min0_ref[...] = part0
            min1_ref[...] = part1
            # pos1 = dist(anchor_i, positive_i): O(tm * d) row-wise dot + tm sqrts.
            pr = prow_ref[...].astype(jnp.float32)                          # (tm, d)
            pr_sq = jnp.sum(pr * pr, axis=1, keepdims=True)
            ap = jnp.sum(a * pr, axis=1, keepdims=True)
            pos_ref[...] = jnp.sqrt(a_sq + pr_sq - 2.0 * ap + EPS_DIST) + EPS_LOSS

        @pl.when(j > 0)
        def _accumulate():
            min0_ref[...] = jnp.minimum(min0_ref[...], part0)
            min1_ref[...] = jnp.minimum(min1_ref[...], part1)

        @pl.when(j == nj - 1)
        def _finalize():
            # sqrt only on per-row scalars (2 * tm per row tile).
            min_neg = jnp.minimum(jnp.sqrt(min0_ref[...]) + EPS_LOSS,
                                  jnp.sqrt(min1_ref[...]) + EPS_LOSS + 10.0)
            loss = jnp.maximum(MARGIN + pos_ref[...] - min_neg, 0.0)        # (tm, 1)
            row_first = i * tm + jax.lax.broadcasted_iota(jnp.int32, (tm, 1), 0)
            out_ref[...] = jnp.where(row_first < n_valid, loss, 0.0)

    return kernel


def loss_hardnet(anchor, positive, *, block_m=None, block_n=None):
    assert anchor.shape == positive.shape, (
        "Input sizes between positive and negative must be equal.")
    assert anchor.ndim == 2, "Input must be a 2D matrix."
    n, d = anchor.shape

    if block_m is None or block_n is None:
        n_pad, tm, tn = _choose_tiles(n)
    else:
        tm, tn = int(block_m), int(block_n)
        assert tm % 8 == 0 and tn % 8 == 0, "tile sizes must be multiples of 8"
        n_pad = _round_up(n, tm * tn // math.gcd(tm, tn))

    anchor = anchor.astype(jnp.float32)
    positive = positive.astype(jnp.float32)
    if n_pad != n:
        pad = n_pad - n
        anchor = jnp.pad(anchor, ((0, pad), (0, 0)))
        positive = jnp.pad(positive, ((0, pad), (0, 0)))

    grid_m, grid_n = n_pad // tm, n_pad // tn
    kernel = _make_loss_hardnet_kernel(n, tm, tn)

    per_row = pl.pallas_call(
        kernel,
        out_shape=jax.ShapeDtypeStruct((n_pad, 1), jnp.float32),
        grid_spec=pltpu.PrefetchScalarGridSpec(
            num_scalar_prefetch=0,
            grid=(grid_m, grid_n),
            in_specs=[
                pl.BlockSpec((tm, d), lambda i, j: (i, 0)),   # anchor rows (resident per row tile)
                pl.BlockSpec((tn, d), lambda i, j: (j, 0)),   # streamed positive column blocks
                pl.BlockSpec((tm, d), lambda i, j: (i, 0)),   # row-aligned positives (for pos1)
            ],
            out_specs=pl.BlockSpec((tm, 1), lambda i, j: (i, 0)),
            scratch_shapes=[
                pltpu.VMEM((tm, 1), jnp.float32),   # running row-min, class 0 (squared)
                pltpu.VMEM((tm, 1), jnp.float32),   # running row-min, class 1 (+10, squared)
                pltpu.VMEM((tm, 1), jnp.float32),   # pos1 (diagonal distances)
            ]),
        compiler_params=pltpu.CompilerParams(
            dimension_semantics=("parallel", "arbitrary"),
            vmem_limit_bytes=32 * 1024 * 1024),
    )(anchor, positive, positive)

    return jnp.sum(per_row) / jnp.float32(n)


def _reference_loss(anchor, positive):
    # Pure-JAX reference mirroring the PyTorch module (for sanity checking).
    d1 = jnp.sum(anchor * anchor, axis=1, keepdims=True)
    d2 = jnp.sum(positive * positive, axis=1, keepdims=True)
    cross = jnp.dot(anchor, positive.T, precision=jax.lax.Precision.HIGHEST)
    m = d1 + d2.T - 2.0 * cross + EPS_DIST
    dist = jnp.sqrt(m) + EPS_LOSS
    n = dist.shape[0]
    eye = jnp.eye(n, dtype=dist.dtype)
    pos1 = jnp.diag(dist)
    d_off = dist + eye * 10.0
    mask = (jnp.where(d_off >= MASK_THRESH, 1.0, 0.0) - 1.0) * -1.0 * 10.0
    d_off = d_off + mask
    min_neg = jnp.min(d_off, axis=1)
    loss = jnp.clip(MARGIN + pos1 - min_neg, 0.0)
    return jnp.mean(loss)


if __name__ == "__main__":
    key = jax.random.PRNGKey(0)
    k1, k2 = jax.random.split(key)
    N, D = 300, 64  # small descriptor batch; N not a tile multiple -> exercises padding

    # Realistic HardNet setup: L2-normalized descriptors, positives correlated
    # with anchors (gives a non-degenerate, nonzero loss).
    a_raw = jax.random.normal(k1, (N, D), dtype=jnp.float32)
    p_raw = a_raw + 0.3 * jax.random.normal(k2, (N, D), dtype=jnp.float32)
    anchor = a_raw / jnp.linalg.norm(a_raw, axis=1, keepdims=True)
    positive = p_raw / jnp.linalg.norm(p_raw, axis=1, keepdims=True)

    # Small tiles force a (3, 3) grid so the tiled running-min / padding /
    # diagonal paths are all exercised at demo scale.
    loss = jax.block_until_ready(loss_hardnet(anchor, positive, block_m=128, block_n=128))
    ref = jax.block_until_ready(_reference_loss(anchor, positive))
    assert jnp.allclose(loss, ref, atol=3e-4, rtol=3e-4), (loss, ref)

    # Also check the auto-tiled (single tile) path.
    loss_auto = jax.block_until_ready(loss_hardnet(anchor, positive))
    assert jnp.allclose(loss_auto, ref, atol=3e-4, rtol=3e-4), (loss_auto, ref)

    print("KERNEL_OK")
</pallas_src>

<mosaic_0001>
module attributes {stable_mosaic.version = 11 : i64} {
  func.func @kernel(%arg0: i32, %arg1: i32, %arg2: memref<128x64xf32, #tpu.memory_space<vmem>>, %arg3: memref<128x64xf32, #tpu.memory_space<vmem>>, %arg4: memref<128x64xf32, #tpu.memory_space<vmem>>, %arg5: memref<128x1xf32, #tpu.memory_space<vmem>>, %arg6: memref<128x1xf32, #tpu.memory_space<vmem>>, %arg7: memref<128x1xf32, #tpu.memory_space<vmem>>, %arg8: memref<128x1xf32, #tpu.memory_space<vmem>>) attributes {dimension_semantics = [#tpu.dimension_semantics<parallel>, #tpu.dimension_semantics<arbitrary>], iteration_bounds = array<i64: 3, 3>, scalar_prefetch = 0 : i64, scratch_operands = 3 : i64, tpu.core_type = #tpu.core_type<tc>, window_params = [{transform_indices = @transform_0, window_bounds = array<i64: 128, 64>}, {transform_indices = @transform_1, window_bounds = array<i64: 128, 64>}, {transform_indices = @transform_2, window_bounds = array<i64: 128, 64>}, {transform_indices = @transform_3, window_bounds = array<i64: 128, 1>}]} {
    %c0 = arith.constant 0 : index
    %c0_0 = arith.constant 0 : index
    %0 = vector.load %arg2[%c0, %c0_0] : memref<128x64xf32, #tpu.memory_space<vmem>>, vector<128x64xf32>
    %c0_1 = arith.constant 0 : index
    %c0_2 = arith.constant 0 : index
    %1 = vector.load %arg3[%c0_1, %c0_2] : memref<128x64xf32, #tpu.memory_space<vmem>>, vector<128x64xf32>
    %2 = arith.mulf %0, %0 : vector<128x64xf32>
    %cst = arith.constant dense<0.000000e+00> : vector<128xf32>
    %3 = vector.multi_reduction <add>, %2, %cst [1] : vector<128x64xf32> to vector<128xf32>
    %4 = vector.shape_cast %3 : vector<128xf32> to vector<128x1xf32>
    %cst_3 = arith.constant 1.000000e+00 : f32
    %5 = vector.broadcast %cst_3 : f32 to vector<1x64xf32>
    %6 = arith.mulf %1, %1 : vector<128x64xf32>
    %cst_4 = arith.constant dense<0.000000e+00> : vector<1x128xf32>
    %7 = tpu.matmul %5, %6, %cst_4 {dimension_numbers = #tpu.dot_dimension_numbers<[1], [1], [0], [0], [0, 0, 1, 0], [], []>} : vector<1x64xf32>, vector<128x64xf32>, vector<1x128xf32> -> vector<1x128xf32>
    %cst_5 = arith.constant dense<0.000000e+00> : vector<128x128xf32>
    %8 = tpu.matmul %0, %1, %cst_5 {dimension_numbers = #tpu.dot_dimension_numbers<[1], [1], [0], [0], [0, 0, 1, 0], [], []>} : vector<128x64xf32>, vector<128x64xf32>, vector<128x128xf32> -> vector<128x128xf32>
    %9 = vector.broadcast %4 : vector<128x1xf32> to vector<128x128xf32>
    %10 = vector.broadcast %7 : vector<1x128xf32> to vector<128x128xf32>
    %11 = arith.addf %9, %10 : vector<128x128xf32>
    %cst_6 = arith.constant 2.000000e+00 : f32
    %12 = vector.broadcast %cst_6 : f32 to vector<128x128xf32>
    %13 = arith.mulf %12, %8 : vector<128x128xf32>
    %14 = arith.subf %11, %13 : vector<128x128xf32>
    %cst_7 = arith.constant 9.99999974E-5 : f32
    %15 = vector.broadcast %cst_7 : f32 to vector<128x128xf32>
    %16 = arith.addf %14, %15 : vector<128x128xf32>
    %c128_i32 = arith.constant 128 : i32
    %17 = arith.muli %arg0, %c128_i32 : i32
    %18 = tpu.iota {dimensions = array<i32: 0>} : vector<128x128xi32>
    %19 = vector.broadcast %17 : i32 to vector<128x128xi32>
    %20 = arith.addi %19, %18 : vector<128x128xi32>
    %c128_i32_8 = arith.constant 128 : i32
    %21 = arith.muli %arg1, %c128_i32_8 : i32
    %22 = tpu.iota {dimensions = array<i32: 1>} : vector<128x128xi32>
    %23 = vector.broadcast %21 : i32 to vector<128x128xi32>
    %24 = arith.addi %23, %22 : vector<128x128xi32>
    %25 = arith.cmpi eq, %20, %24 : vector<128x128xi32>
    %c300_i32 = arith.constant 300 : i32
    %26 = vector.broadcast %c300_i32 : i32 to vector<128x128xi32>
    %27 = arith.cmpi slt, %24, %26 : vector<128x128xi32>
    %cst_9 = arith.constant 6.39998398E-5 : f32
    %28 = vector.broadcast %cst_9 : f32 to vector<128x128xf32>
    %29 = arith.cmpf olt, %16, %28 : vector<128x128xf32>
    %30 = arith.ori %25, %29 : vector<128x128xi1>
    %cst_10 = arith.constant dense<true> : vector<128x128xi1>
    %31 = arith.xori %30, %cst_10 : vector<128x128xi1>
    %32 = arith.andi %27, %31 : vector<128x128xi1>
    %cst_11 = arith.constant 0x7F800000 : f32
    %33 = vector.broadcast %cst_11 : f32 to vector<128x128xf32>
    %34 = arith.select %32, %16, %33 : vector<128x128xi1>, vector<128x128xf32>
    %cst_12 = arith.constant dense<0x7F800000> : vector<128xf32>
    %35 = vector.multi_reduction <minimumf>, %34, %cst_12 [1] : vector<128x128xf32> to vector<128xf32>
    %36 = vector.shape_cast %35 : vector<128xf32> to vector<128x1xf32>
    %37 = arith.andi %27, %30 : vector<128x128xi1>
    %cst_13 = arith.constant 0x7F800000 : f32
    %38 = vector.broadcast %cst_13 : f32 to vector<128x128xf32>
    %39 = arith.select %37, %16, %38 : vector<128x128xi1>, vector<128x128xf32>
    %cst_14 = arith.constant dense<0x7F800000> : vector<128xf32>
    %40 = vector.multi_reduction <minimumf>, %39, %cst_14 [1] : vector<128x128xf32> to vector<128xf32>
    %41 = vector.shape_cast %40 : vector<128xf32> to vector<128x1xf32>
    %c0_i32 = arith.constant 0 : i32
    %42 = arith.cmpi eq, %arg1, %c0_i32 : i32
    %43 = arith.extui %42 : i1 to i32
    %c0_i32_15 = arith.constant 0 : i32
    %44 = arith.cmpi ne, %43, %c0_i32_15 : i32
    scf.if %44 {
      %c0_19 = arith.constant 0 : index
      %c0_20 = arith.constant 0 : index
      %51 = vector.load %arg6[%c0_19, %c0_20] : memref<128x1xf32, #tpu.memory_space<vmem>>, vector<128x1xf32>
      tpu.vector_store %arg6[%c0_19, %c0_20], %36 {strides = array<i32>} : memref<128x1xf32, #tpu.memory_space<vmem>>, vector<128x1xf32>,
      %c0_21 = arith.constant 0 : index
      %c0_22 = arith.constant 0 : index
      %52 = vector.load %arg7[%c0_21, %c0_22] : memref<128x1xf32, #tpu.memory_space<vmem>>, vector<128x1xf32>
      tpu.vector_store %arg7[%c0_21, %c0_22], %41 {strides = array<i32>} : memref<128x1xf32, #tpu.memory_space<vmem>>, vector<128x1xf32>,
      %c0_23 = arith.constant 0 : index
      %c0_24 = arith.constant 0 : index
      %53 = vector.load %arg4[%c0_23, %c0_24] : memref<128x64xf32, #tpu.memory_space<vmem>>, vector<128x64xf32>
      %54 = arith.mulf %53, %53 : vector<128x64xf32>
      %cst_25 = arith.constant dense<0.000000e+00> : vector<128xf32>
      %55 = vector.multi_reduction <add>, %54, %cst_25 [1] : vector<128x64xf32> to vector<128xf32>
      %56 = vector.shape_cast %55 : vector<128xf32> to vector<128x1xf32>
      %57 = arith.mulf %0, %53 : vector<128x64xf32>
      %cst_26 = arith.constant dense<0.000000e+00> : vector<128xf32>
      %58 = vector.multi_reduction <add>, %57, %cst_26 [1] : vector<128x64xf32> to vector<128xf32>
      %59 = vector.shape_cast %58 : vector<128xf32> to vector<128x1xf32>
      %60 = arith.addf %4, %56 : vector<128x1xf32>
      %cst_27 = arith.constant 2.000000e+00 : f32
      %61 = vector.broadcast %cst_27 : f32 to vector<128x1xf32>
      %62 = arith.mulf %61, %59 : vector<128x1xf32>
      %63 = arith.subf %60, %62 : vector<128x1xf32>
      %cst_28 = arith.constant 9.99999974E-5 : f32
      %64 = vector.broadcast %cst_28 : f32 to vector<128x1xf32>
      %65 = arith.addf %63, %64 : vector<128x1xf32>
      %66 = math.sqrt %65 : vector<128x1xf32>
      %cst_29 = arith.constant 9.99999993E-9 : f32
      %67 = vector.broadcast %cst_29 : f32 to vector<128x1xf32>
      %68 = arith.addf %66, %67 : vector<128x1xf32>
      %c0_30 = arith.constant 0 : index
      %c0_31 = arith.constant 0 : index
      %69 = vector.load %arg8[%c0_30, %c0_31] : memref<128x1xf32, #tpu.memory_space<vmem>>, vector<128x1xf32>
      tpu.vector_store %arg8[%c0_30, %c0_31], %68 {strides = array<i32>} : memref<128x1xf32, #tpu.memory_space<vmem>>, vector<128x1xf32>,
    } else {
    }
    %c0_i32_16 = arith.constant 0 : i32
    %45 = arith.cmpi sgt, %arg1, %c0_i32_16 : i32
    %46 = arith.extui %45 : i1 to i32
    %c0_i32_17 = arith.constant 0 : i32
    %47 = arith.cmpi ne, %46, %c0_i32_17 : i32
    scf.if %47 {
      %c0_19 = arith.constant 0 : index
      %c0_20 = arith.constant 0 : index
      %51 = vector.load %arg6[%c0_19, %c0_20] : memref<128x1xf32, #tpu.memory_space<vmem>>, vector<128x1xf32>
      %52 = arith.minimumf %51, %36 : vector<128x1xf32>
      %c0_21 = arith.constant 0 : index
      %c0_22 = arith.constant 0 : index
      %53 = vector.load %arg6[%c0_21, %c0_22] : memref<128x1xf32, #tpu.memory_space<vmem>>, vector<128x1xf32>
      tpu.vector_store %arg6[%c0_21, %c0_22], %52 {strides = array<i32>} : memref<128x1xf32, #tpu.memory_space<vmem>>, vector<128x1xf32>,
      %c0_23 = arith.constant 0 : index
      %c0_24 = arith.constant 0 : index
      %54 = vector.load %arg7[%c0_23, %c0_24] : memref<128x1xf32, #tpu.memory_space<vmem>>, vector<128x1xf32>
      %55 = arith.minimumf %54, %41 : vector<128x1xf32>
      %c0_25 = arith.constant 0 : index
      %c0_26 = arith.constant 0 : index
      %56 = vector.load %arg7[%c0_25, %c0_26] : memref<128x1xf32, #tpu.memory_space<vmem>>, vector<128x1xf32>
      tpu.vector_store %arg7[%c0_25, %c0_26], %55 {strides = array<i32>} : memref<128x1xf32, #tpu.memory_space<vmem>>, vector<128x1xf32>,
    } else {
    }
    %c2_i32 = arith.constant 2 : i32
    %48 = arith.cmpi eq, %arg1, %c2_i32 : i32
    %49 = arith.extui %48 : i1 to i32
    %c0_i32_18 = arith.constant 0 : i32
    %50 = arith.cmpi ne, %49, %c0_i32_18 : i32
    scf.if %50 {
      %c0_19 = arith.constant 0 : index
      %c0_20 = arith.constant 0 : index
      %51 = vector.load %arg6[%c0_19, %c0_20] : memref<128x1xf32, #tpu.memory_space<vmem>>, vector<128x1xf32>
      %52 = math.sqrt %51 : vector<128x1xf32>
      %cst_21 = arith.constant 9.99999993E-9 : f32
      %53 = vector.broadcast %cst_21 : f32 to vector<128x1xf32>
      %54 = arith.addf %52, %53 : vector<128x1xf32>
      %c0_22 = arith.constant 0 : index
      %c0_23 = arith.constant 0 : index
      %55 = vector.load %arg7[%c0_22, %c0_23] : memref<128x1xf32, #tpu.memory_space<vmem>>, vector<128x1xf32>
      %56 = math.sqrt %55 : vector<128x1xf32>
      %cst_24 = arith.constant 9.99999993E-9 : f32
      %57 = vector.broadcast %cst_24 : f32 to vector<128x1xf32>
      %58 = arith.addf %56, %57 : vector<128x1xf32>
      %cst_25 = arith.constant 1.000000e+01 : f32
      %59 = vector.broadcast %cst_25 : f32 to vector<128x1xf32>
      %60 = arith.addf %58, %59 : vector<128x1xf32>
      %61 = arith.minimumf %54, %60 : vector<128x1xf32>
      %c0_26 = arith.constant 0 : index
      %c0_27 = arith.constant 0 : index
      %62 = vector.load %arg8[%c0_26, %c0_27] : memref<128x1xf32, #tpu.memory_space<vmem>>, vector<128x1xf32>
      %cst_28 = arith.constant 1.000000e+00 : f32
      %63 = vector.broadcast %cst_28 : f32 to vector<128x1xf32>
      %64 = arith.addf %63, %62 : vector<128x1xf32>
      %65 = arith.subf %64, %61 : vector<128x1xf32>
      %cst_29 = arith.constant 0.000000e+00 : f32
      %66 = vector.broadcast %cst_29 : f32 to vector<128x1xf32>
      %67 = arith.maximumf %65, %66 : vector<128x1xf32>
      %c128_i32_30 = arith.constant 128 : i32
      %68 = arith.muli %arg0, %c128_i32_30 : i32
      %69 = tpu.iota {dimensions = array<i32: 0>} : vector<128x1xi32>
      %70 = vector.broadcast %68 : i32 to vector<128x1xi32>
      %71 = arith.addi %70, %69 : vector<128x1xi32>
      %c300_i32_31 = arith.constant 300 : i32
      %72 = vector.broadcast %c300_i32_31 : i32 to vector<128x1xi32>
      %73 = arith.cmpi slt, %71, %72 : vector<128x1xi32>
      %cst_32 = arith.constant 0.000000e+00 : f32
      %74 = vector.broadcast %cst_32 : f32 to vector<128x1xf32>
      %75 = arith.select %73, %67, %74 : vector<128x1xi1>, vector<128x1xf32>
      %c0_33 = arith.constant 0 : index
      %c0_34 = arith.constant 0 : index
      %76 = vector.load %arg5[%c0_33, %c0_34] : memref<128x1xf32, #tpu.memory_space<vmem>>, vector<128x1xf32>
      tpu.vector_store %arg5[%c0_33, %c0_34], %75 {strides = array<i32>} : memref<128x1xf32, #tpu.memory_space<vmem>>, vector<128x1xf32>,
    } else {
    }
    return
  }
  func.func @transform_0(%arg0: i32, %arg1: i32) -> (i32, i32) {
    %c0_i32 = arith.constant 0 : i32
    %c0_i32_0 = arith.constant 0 : i32
    return %arg0, %c0_i32 : i32, i32
  }
  func.func @transform_1(%arg0: i32, %arg1: i32) -> (i32, i32) {
    %c0_i32 = arith.constant 0 : i32
    %c0_i32_0 = arith.constant 0 : i32
    return %arg1, %c0_i32 : i32, i32
  }
  func.func @transform_2(%arg0: i32, %arg1: i32) -> (i32, i32) {
    %c0_i32 = arith.constant 0 : i32
    %c0_i32_0 = arith.constant 0 : i32
    return %arg0, %c0_i32 : i32, i32
  }
  func.func @transform_3(%arg0: i32, %arg1: i32) -> (i32, i32) {
    %c0_i32 = arith.constant 0 : i32
    %c0_i32_0 = arith.constant 0 : i32
    return %arg0, %c0_i32 : i32, i32
  }
}

</mosaic_0001>

<llo_original>
// kernel: tpu_custom_call.1
$region0: #{tpu_custom_call.1}
  #allocation0 [shape = 'u32[]', space=smem, size = 0x4, offset = 0x4, fixed_abs, tag = 'smem constant byte address 0x4 - core index']
  #allocation1 [shape = 'u32[144,128]{1,0:T(1,128)}', space=vmem, size = 0x12000, scoped, tag = 'internal scratch']
  #allocation2 [shape = 'f32[128,1]{1,0:T(8,128)}', space=vmem, size = 0x10000, scoped, tag = 'scratch operand']
  #allocation3 [shape = 'f32[128,1]{1,0:T(8,128)}', space=vmem, size = 0x10000, scoped, tag = 'scratch operand']
  #allocation4 [shape = 'f32[128,1]{1,0:T(8,128)}', space=vmem, size = 0x10000, scoped, tag = 'scratch operand']
  %s0 = inlined_call_operand.vmem [shape: f32[384,64], index: 0, kind: input, shape index: {}]
  %s1 = inlined_call_operand.vmem [shape: f32[384,64], index: 1, kind: input, shape index: {}]
  %s2 = inlined_call_operand.vmem [shape: f32[384,64], index: 2, kind: input, shape index: {}]
  %s3 = inlined_call_operand.vmem [shape: f32[384,1], index: 3, kind: output, shape index: {}]
  %s4 = sld [smem:[#allocation0]]
  $region57: #{tpu_custom_call.1} parent=0
    _
  %s6 = ssub.s32 1, %s4
  %s7 = scalar_select 0, %s6, %s4
  loop: start=0, step=1, limit=11
  $region2: #{tpu_custom_call.1} parent=0 // loop_pre_header
    _
  $region3: #{tpu_custom_call.1} parent=0 // loop_header
    %s9 = sphi 0, %s13
    %p10 = scmp.ge.s32.totalorder %s9, 11
    %s16 = sphi 0, %s28
    %s17 = sphi 0, %s24
    %s18 = sphi 0, %s16
    %s19 = sphi 0, %s17
    %s20 = sphi 0, %s18
    %s21 = sphi 0, %s19
    %s31 = sphi 0, %s33
    %s34 = sphi 0, %s31
    %s35 = sphi 0, %s34
    %s51 = sphi 0, %s35
    %s57 = sphi 0, %s59
    %s60 = sphi 0, %s57
    %s61 = sphi 0, %s60
    %s77 = sphi 0, %s61
    %s83 = sphi 0, %s85
    %s86 = sphi 0, %s83
    %s87 = sphi 0, %s86
    %s103 = sphi 0, %s87
    %s109 = sphi 0, %s111
    %s112 = sphi 0, %s109
    %s113 = sphi 0, %s112
    %s129 = sphi 0, %s113
  $region4: #{tpu_custom_call.1} parent=0 // loop_header_branch
    %12 = sbr.rel (%p10) target = $region8
  $region5: #{tpu_custom_call.1} parent=0 // loop_body
    %s14 = ssub.s32 %s9, 1
    %s15 = ssub.s32 %s9, 2
    %s22 = sadd.s32 1, %s17
    %p23 = scmp.ge.s32.totalorder %s22, 3
    %s24 = scalar_select %p23, 0, %s22
    %s25 = sadd.s32 1, %s16
    %s26 = scalar_select %p23, %s25, %s16
    %p27 = scmp.ge.s32.totalorder %s26, 3
    %s28 = scalar_select %p27, 0, %s26
    %s29 = ssub.s32 %s16, %s28
    %p30 = scmp.eq.s32.totalorder %s29, 0
    %s32 = sadd.s32 %s31, 1
    %s33 = scalar_select %p30, %s31, %s32
    %p36 = pneg %p30
    %p37 = scmp.eq.s32.totalorder %s9, 8
    %p38 = por %p36, %p37
    %p39 = scmp.ne.s32.totalorder %s31, %s34
    %p40 = scmp.eq.s32.totalorder %s9, 0
    %p41 = por %p39, %p40
    %p42 = scmp.ne.s32.totalorder %s31, %s34
    %p43 = scmp.eq.s32.totalorder %s14, 8
    %p44 = por %p42, %p43
    %p45 = scmp.ne.s32.totalorder %s34, %s35
    %p46 = scmp.eq.s32.totalorder %s14, 0
    %p47 = por %p45, %p46
    %p48 = scmp.ne.s32.totalorder %s34, %s35
    %p49 = scmp.eq.s32.totalorder %s15, 8
    %p50 = por %p48, %p49
    %p52 = scmp.ne.s32.totalorder %s35, %s51
    %p53 = scmp.eq.s32.totalorder %s15, 0
    %p54 = por %p52, %p53
    %s55 = ssub.s32 %s17, %s24
    %p56 = scmp.eq.s32.totalorder %s55, 0
    %s58 = sadd.s32 %s57, 1
    %s59 = scalar_select %p56, %s57, %s58
    %p62 = pneg %p56
    %p63 = scmp.eq.s32.totalorder %s9, 8
    %p64 = por %p62, %p63
    %p65 = scmp.ne.s32.totalorder %s57, %s60
    %p66 = scmp.eq.s32.totalorder %s9, 0
    %p67 = por %p65, %p66
    %p68 = scmp.ne.s32.totalorder %s57, %s60
    %p69 = scmp.eq.s32.totalorder %s14, 8
    %p70 = por %p68, %p69
    %p71 = scmp.ne.s32.totalorder %s60, %s61
    %p72 = scmp.eq.s32.totalorder %s14, 0
    %p73 = por %p71, %p72
    %p74 = scmp.ne.s32.totalorder %s60, %s61
    %p75 = scmp.eq.s32.totalorder %s15, 8
    %p76 = por %p74, %p75
    %p78 = scmp.ne.s32.totalorder %s61, %s77
    %p79 = scmp.eq.s32.totalorder %s15, 0
    %p80 = por %p78, %p79
    %s81 = ssub.s32 %s16, %s28
    %p82 = scmp.eq.s32.totalorder %s81, 0
    %s84 = sadd.s32 %s83, 1
    %s85 = scalar_select %p82, %s83, %s84
    %p88 = pneg %p82
    %p89 = scmp.eq.s32.totalorder %s9, 8
    %p90 = por %p88, %p89
    %p91 = scmp.ne.s32.totalorder %s83, %s86
    %p92 = scmp.eq.s32.totalorder %s9, 0
    %p93 = por %p91, %p92
    %p94 = scmp.ne.s32.totalorder %s83, %s86
    %p95 = scmp.eq.s32.totalorder %s14, 8
    %p96 = por %p94, %p95
    %p97 = scmp.ne.s32.totalorder %s86, %s87
    %p98 = scmp.eq.s32.totalorder %s14, 0
    %p99 = por %p97, %p98
    %p100 = scmp.ne.s32.totalorder %s86, %s87
    %p101 = scmp.eq.s32.totalorder %s15, 8
    %p102 = por %p100, %p101
    %p104 = scmp.ne.s32.totalorder %s87, %s103
    %p105 = scmp.eq.s32.totalorder %s15, 0
    %p106 = por %p104, %p105
    %s107 = ssub.s32 %s16, %s28
    %p108 = scmp.eq.s32.totalorder %s107, 0
    %s110 = sadd.s32 %s109, 1
    %s111 = scalar_select %p108, %s109, %s110
    %p114 = pneg %p108
    %p115 = scmp.eq.s32.totalorder %s9, 8
    %p116 = por %p114, %p115
    %p117 = scmp.ne.s32.totalorder %s109, %s112
    %p118 = scmp.eq.s32.totalorder %s9, 0
    %p119 = por %p117, %p118
    %p120 = scmp.ne.s32.totalorder %s109, %s112
    %p121 = scmp.eq.s32.totalorder %s14, 8
    %p122 = por %p120, %p121
    %p123 = scmp.ne.s32.totalorder %s112, %s113
    %p124 = scmp.eq.s32.totalorder %s14, 0
    %p125 = por %p123, %p124
    %p126 = scmp.ne.s32.totalorder %s112, %s113
    %p127 = scmp.eq.s32.totalorder %s15, 8
    %p128 = por %p126, %p127
    %p130 = scmp.ne.s32.totalorder %s113, %s129
    %p131 = scmp.eq.s32.totalorder %s15, 0
    %p132 = por %p130, %p131
    %p133 = scmp.le.s32.totalorder 1, %s9
    %p134 = scmp.lt.s32.totalorder %s9, 10
    %p135 = pnand %p133, %p134
    %p136 = pneg %p135
    // Predicated region
    $region9: #{tpu_custom_call.1} parent=5 // pred_check
      _
    $region10: #{tpu_custom_call.1} parent=5 // pred_check_branch
      %138 = sbr.rel (%p135) target = $region12
    $region11: #{tpu_custom_call.1} parent=5 // pred_region
      %s139 = ssub.s32 %s9, 1
    $region12: #{tpu_custom_call.1} parent=5 // pred_fallthru
      _
    %p140 = scmp.lt.s32.totalorder %s9, 9
    // Predicated region
    $region13: #{tpu_custom_call.1} parent=5 // pred_check
      %p141 = pneg %p140
    $region14: #{tpu_custom_call.1} parent=5 // pred_check_branch
      %143 = sbr.rel (%p141) target = $region16
    $region15: #{tpu_custom_call.1} parent=5 // pred_region
      // Predicated region
      $region17: #{tpu_custom_call.1} parent=15 // pred_check
        %p144 = pneg %p41
      $region18: #{tpu_custom_call.1} parent=15 // pred_check_branch
        %146 = sbr.rel (%p144) target = $region20
      $region19: #{tpu_custom_call.1} parent=15 // pred_region
        %s147 = smul.u32 16, %s16
        %p148 = scmp.lt.s32.totalorder %s147, 47
        %s149 = scalar_select %p148, %s147, 47
        %s150 = smul.addr %s149, 8
        %s151 = scalar_lea.vmem %s0, %s150
        %s152 = smul.u32 16, %s16
      $region20: #{tpu_custom_call.1} parent=15 // pred_fallthru
        _
      // Predicated region
      $region21: #{tpu_custom_call.1} parent=15 // pred_check
        %p153 = pneg %p67
      $region22: #{tpu_custom_call.1} parent=15 // pred_check_branch
        %155 = sbr.rel (%p153) target = $region24
      $region23: #{tpu_custom_call.1} parent=15 // pred_region
        %s156 = smul.u32 16, %s17
        %p157 = scmp.lt.s32.totalorder %s156, 47
        %s158 = scalar_select %p157, %s156, 47
        %s159 = smul.addr %s158, 8
        %s160 = scalar_lea.vmem %s1, %s159
        %s161 = smul.u32 16, %s17
      $region24: #{tpu_custom_call.1} parent=15 // pred_fallthru
        _
      // Predicated region
      $region25: #{tpu_custom_call.1} parent=15 // pred_check
        %p162 = pneg %p93
      $region26: #{tpu_custom_call.1} parent=15 // pred_check_branch
        %164 = sbr.rel (%p162) target = $region28
      $region27: #{tpu_custom_call.1} parent=15 // pred_region
        %s165 = smul.u32 16, %s16
        %p166 = scmp.lt.s32.totalorder %s165, 47
        %s167 = scalar_select %p166, %s165, 47
        %s168 = smul.addr %s167, 8
        %s169 = scalar_lea.vmem %s2, %s168
        %s170 = smul.u32 16, %s16
      $region28: #{tpu_custom_call.1} parent=15 // pred_fallthru
        _
    $region16: #{tpu_custom_call.1} parent=5 // pred_fallthru
      _
    %p171 = scmp.le.s32.totalorder 1, %s9
    %p172 = scmp.lt.s32.totalorder %s9, 10
    %p173 = pnand %p171, %p172
    %p174 = pneg %p173
    // Predicated region
    $region29: #{tpu_custom_call.1} parent=5 // pred_check
      _
    $region30: #{tpu_custom_call.1} parent=5 // pred_check_branch
      %176 = sbr.rel (%p173) target = $region32
    $region31: #{tpu_custom_call.1} parent=5 // pred_region
      %s177 = ssub.s32 %s9, 1
      %s178 = smul.u32 16, %s18
      %p179 = scmp.lt.s32.totalorder %s178, 47
      %s180 = scalar_select %p179, %s178, 47
      %s181 = smul.addr %s180, 8
      %s182 = scalar_lea.vmem %s0, %s181
      %p183 = pneg %p47
      %p184 = pneg %p44
      %s185 = smul.u32 16, %s19
      %p186 = scmp.lt.s32.totalorder %s185, 47
      %s187 = scalar_select %p186, %s185, 47
      %s188 = smul.addr %s187, 8
      %s189 = scalar_lea.vmem %s1, %s188
      %p190 = pneg %p73
      %p191 = pneg %p70
      %s192 = smul.u32 16, %s18
      %p193 = scmp.lt.s32.totalorder %s192, 47
      %s194 = scalar_select %p193, %s192, 47
      %s195 = smul.addr %s194, 8
      %s196 = scalar_lea.vmem %s2, %s195
      %p197 = pneg %p99
      %p198 = pneg %p96
      %p199 = pneg %p125
      %p200 = pneg %p122
      %s201 = smul.u32 16, %s18
      %p202 = scmp.lt.s32.totalorder %s201, 47
      %s203 = scalar_select %p202, %s201, 47
      %s204 = smul.addr %s203, 8
      %s205 = scalar_lea.vmem %s3, %s204
      %s206 = smul.u32 16, %s18
      %p207 = scmp.lt.s32.totalorder %s206, 47
      %s208 = scalar_select %p207, %s206, 47
      %s209 = smul.addr %s208, 8
      %s210 = scalar_lea.vmem %s0, %s209
      %s211 = smul.u32 16, %s18
      %s212 = smul.u32 16, %s19
      %p213 = scmp.lt.s32.totalorder %s212, 47
      %s214 = scalar_select %p213, %s212, 47
      %s215 = smul.addr %s214, 8
      %s216 = scalar_lea.vmem %s1, %s215
      %s217 = smul.u32 16, %s19
      %s218 = smul.u32 16, %s18
      %p219 = scmp.lt.s32.totalorder %s218, 47
      %s220 = scalar_select %p219, %s218, 47
      %s221 = smul.addr %s220, 8
      %s222 = scalar_lea.vmem %s2, %s221
      %s223 = smul.u32 16, %s18
      %s224 = smul.u32 16, %s18
      %p225 = scmp.lt.s32.totalorder %s224, 47
      %s226 = scalar_select %p225, %s224, 47
      %s227 = smul.addr %s226, 8
      %s228 = scalar_lea.vmem %s3, %s227
      %s229 = smul.u32 16, %s18
      %v230 = vld [vmem:[%s210] sm:$0xff]
      %v231 = vld [vmem:[%s210 + $0x8] sm:$0xff]
      %v232 = vld [vmem:[%s210 + $0x10] sm:$0xff]
      %v233 = vld [vmem:[%s210 + $0x18] sm:$0xff]
      %v234 = vld [vmem:[%s210 + $0x20] sm:$0xff]
      %v235 = vld [vmem:[%s210 + $0x28] sm:$0xff]
      %v236 = vld [vmem:[%s210 + $0x30] sm:$0xff]
      %v237 = vld [vmem:[%s210 + $0x38] sm:$0xff]
      %v238 = vld [vmem:[%s210 + $0x40] sm:$0xff]
      %v239 = vld [vmem:[%s210 + $0x48] sm:$0xff]
      %v240 = vld [vmem:[%s210 + $0x50] sm:$0xff]
      %v241 = vld [vmem:[%s210 + $0x58] sm:$0xff]
      %v242 = vld [vmem:[%s210 + $0x60] sm:$0xff]
      %v243 = vld [vmem:[%s210 + $0x68] sm:$0xff]
      %v244 = vld [vmem:[%s210 + $0x70] sm:$0xff]
      %v245 = vld [vmem:[%s210 + $0x78] sm:$0xff]
      %v246 = vld [vmem:[%s216] sm:$0xff]
      %v247 = vld [vmem:[%s216 + $0x8] sm:$0xff]
      %v248 = vld [vmem:[%s216 + $0x10] sm:$0xff]
      %v249 = vld [vmem:[%s216 + $0x18] sm:$0xff]
      %v250 = vld [vmem:[%s216 + $0x20] sm:$0xff]
      %v251 = vld [vmem:[%s216 + $0x28] sm:$0xff]
      %v252 = vld [vmem:[%s216 + $0x30] sm:$0xff]
      %v253 = vld [vmem:[%s216 + $0x38] sm:$0xff]
      %v254 = vld [vmem:[%s216 + $0x40] sm:$0xff]
      %v255 = vld [vmem:[%s216 + $0x48] sm:$0xff]
      %v256 = vld [vmem:[%s216 + $0x50] sm:$0xff]
      %v257 = vld [vmem:[%s216 + $0x58] sm:$0xff]
      %v258 = vld [vmem:[%s216 + $0x60] sm:$0xff]
      %v259 = vld [vmem:[%s216 + $0x68] sm:$0xff]
      %v260 = vld [vmem:[%s216 + $0x70] sm:$0xff]
      %v261 = vld [vmem:[%s216 + $0x78] sm:$0xff]
      %v262 = vmul.f32 %v230, %v230
      %v263 = vmul.f32 %v231, %v231
      %v264 = vmul.f32 %v232, %v232
      %v265 = vmul.f32 %v233, %v233
      %v266 = vmul.f32 %v234, %v234
      %v267 = vmul.f32 %v235, %v235
      %v268 = vmul.f32 %v236, %v236
      %v269 = vmul.f32 %v237, %v237
      %v270 = vmul.f32 %v238, %v238
      %v271 = vmul.f32 %v239, %v239
      %v272 = vmul.f32 %v240, %v240
      %v273 = vmul.f32 %v241, %v241
      %v274 = vmul.f32 %v242, %v242
      %v275 = vmul.f32 %v243, %v243
      %v276 = vmul.f32 %v244, %v244
      %v277 = vmul.f32 %v245, %v245
      %vm278 = vcmask 523264
      %v279 = vsel %vm278, %v262, 0.0
      %280 = vadd.xlane.f32.xlu0 %v279
      %v281 = vpop.xlane.xlu0 %280
      %v282 = vsel %vm278, %v263, 0.0
      %283 = vadd.xlane.f32.xlu0 %v282
      %v284 = vpop.xlane.xlu0 %283
      %v285 = vsel %vm278, %v264, 0.0
      %286 = vadd.xlane.f32.xlu0 %v285
      %v287 = vpop.xlane.xlu0 %286
      %v288 = vsel %vm278, %v265, 0.0
      %289 = vadd.xlane.f32.xlu0 %v288
      %v290 = vpop.xlane.xlu0 %289
      %v291 = vsel %vm278, %v266, 0.0
      %292 = vadd.xlane.f32.xlu0 %v291
      %v293 = vpop.xlane.xlu0 %292
      %v294 = vsel %vm278, %v267, 0.0
      %295 = vadd.xlane.f32.xlu0 %v294
      %v296 = vpop.xlane.xlu0 %295
      %v297 = vsel %vm278, %v268, 0.0
      %298 = vadd.xlane.f32.xlu0 %v297
      %v299 = vpop.xlane.xlu0 %298
      %v300 = vsel %vm278, %v269, 0.0
      %301 = vadd.xlane.f32.xlu0 %v300
      %v302 = vpop.xlane.xlu0 %301
      %v303 = vsel %vm278, %v270, 0.0
      %304 = vadd.xlane.f32.xlu0 %v303
      %v305 = vpop.xlane.xlu0 %304
      %v306 = vsel %vm278, %v271, 0.0
      %307 = vadd.xlane.f32.xlu0 %v306
      %v308 = vpop.xlane.xlu0 %307
      %v309 = vsel %vm278, %v272, 0.0
      %310 = vadd.xlane.f32.xlu0 %v309
      %v311 = vpop.xlane.xlu0 %310
      %v312 = vsel %vm278, %v273, 0.0
      %313 = vadd.xlane.f32.xlu0 %v312
      %v314 = vpop.xlane.xlu0 %313
      %v315 = vsel %vm278, %v274, 0.0
      %316 = vadd.xlane.f32.xlu0 %v315
      %v317 = vpop.xlane.xlu0 %316
      %v318 = vsel %vm278, %v275, 0.0
      %319 = vadd.xlane.f32.xlu0 %v318
      %v320 = vpop.xlane.xlu0 %319
      %v321 = vsel %vm278, %v276, 0.0
      %322 = vadd.xlane.f32.xlu0 %v321
      %v323 = vpop.xlane.xlu0 %322
      %v324 = vsel %vm278, %v277, 0.0
      %325 = vadd.xlane.f32.xlu0 %v324
      %v326 = vpop.xlane.xlu0 %325
      %v327 = vmul.f32 %v246, %v246
      %v328 = vmul.f32 %v247, %v247
      %v329 = vmul.f32 %v248, %v248
      %v330 = vmul.f32 %v249, %v249
      %v331 = vmul.f32 %v250, %v250
      %v332 = vmul.f32 %v251, %v251
      %v333 = vmul.f32 %v252, %v252
      %v334 = vmul.f32 %v253, %v253
      %v335 = vmul.f32 %v254, %v254
      %v336 = vmul.f32 %v255, %v255
      %v337 = vmul.f32 %v256, %v256
      %v338 = vmul.f32 %v257, %v257
      %v339 = vmul.f32 %v258, %v258
      %v340 = vmul.f32 %v259, %v259
      %v341 = vmul.f32 %v260, %v260
      %v342 = vmul.f32 %v261, %v261
      %v344 = vsel %vm278, 1.0, 0
      %v347 = vsel %vm278, %v327, 0
      %v350 = vsel %vm278, %v328, 0
      %v353 = vsel %vm278, %v329, 0
      %v356 = vsel %vm278, %v330, 0
      %v359 = vsel %vm278, %v331, 0
      %v362 = vsel %vm278, %v332, 0
      %v365 = vsel %vm278, %v333, 0
      %v368 = vsel %vm278, %v334, 0
      %v371 = vsel %vm278, %v335, 0
      %v374 = vsel %vm278, %v336, 0
      %v377 = vsel %vm278, %v337, 0
      %v380 = vsel %vm278, %v338, 0
      %v383 = vsel %vm278, %v339, 0
      %v386 = vsel %vm278, %v340, 0
      %v389 = vsel %vm278, %v341, 0
      %v392 = vsel %vm278, %v342, 0
      %394 = vmatprep.subr.mxu0 0.0
      %395 = vmatpush1.xpose.msra.mxu0 %v392
      %396 = vmatprep.subr.mxu0 0.0
      %397 = vmatpush1.xpose.msra.mxu0 %v389
      %398 = vmatprep.subr.mxu0 0.0
      %399 = vmatpush1.xpose.msra.mxu0 %v386
      %400 = vmatprep.subr.mxu0 0.0
      %401 = vmatpush1.xpose.msra.mxu0 %v383
      %402 = vmatprep.subr.mxu0 0.0
      %403 = vmatpush1.xpose.msra.mxu0 %v380
      %404 = vmatprep.subr.mxu0 0.0
      %405 = vmatpush1.xpose.msra.mxu0 %v377
      %406 = vmatprep.subr.mxu0 0.0
      %407 = vmatpush1.xpose.msra.mxu0 %v374
      %408 = vmatprep.subr.mxu0 0.0
      %409 = vmatpush1.xpose.msra.mxu0 %v371
      %410 = vmatprep.subr.mxu0 0.0
      %411 = vmatpush1.xpose.msra.mxu0 %v368
      %412 = vmatprep.subr.mxu0 0.0
      %413 = vmatpush1.xpose.msra.mxu0 %v365
      %414 = vmatprep.subr.mxu0 0.0
      %415 = vmatpush1.xpose.msra.mxu0 %v362
      %416 = vmatprep.subr.mxu0 0.0
      %417 = vmatpush1.xpose.msra.mxu0 %v359
      %418 = vmatprep.subr.mxu0 0.0
      %419 = vmatpush1.xpose.msra.mxu0 %v356
      %420 = vmatprep.subr.mxu0 0.0
      %421 = vmatpush1.xpose.msra.mxu0 %v353
      %422 = vmatprep.subr.mxu0 0.0
      %423 = vmatpush1.xpose.msra.mxu0 %v350
      %424 = vmatprep.subr.mxu0 0.0
      %425 = vmatpush1.xpose.msra.mxu0 %v347
      %426 = vmatprep.subr.mxu0 0.0
      %427 = vmatpush2.xpose.msra.mxu0 0.0
      %428 = vmatprep.subr.mxu0 0.0
      %429 = vmatpush2.xpose.msra.mxu0 0.0
      %430 = vmatprep.subr.mxu0 0.0
      %431 = vmatpush2.xpose.msra.mxu0 0.0
      %432 = vmatprep.subr.mxu0 0.0
      %433 = vmatpush2.xpose.msra.mxu0 0.0
      %434 = vmatprep.subr.mxu0 0.0
      %435 = vmatpush2.xpose.msra.mxu0 0.0
      %436 = vmatprep.subr.mxu0 0.0
      %437 = vmatpush2.xpose.msra.mxu0 0.0
      %438 = vmatprep.subr.mxu0 0.0
      %439 = vmatpush2.xpose.msra.mxu0 0.0
      %440 = vmatprep.subr.mxu0 0.0
      %441 = vmatpush2.xpose.msra.mxu0 0.0
      %442 = vmatprep.subr.mxu0 0.0
      %443 = vmatpush2.xpose.msra.mxu0 0.0
      %444 = vmatprep.subr.mxu0 0.0
      %445 = vmatpush2.xpose.msra.mxu0 0.0
      %446 = vmatprep.subr.mxu0 0.0
      %447 = vmatpush2.xpose.msra.mxu0 0.0
      %448 = vmatprep.subr.mxu0 0.0
      %449 = vmatpush2.xpose.msra.mxu0 0.0
      %450 = vmatprep.subr.mxu0 0.0
      %451 = vmatpush2.xpose.msra.mxu0 0.0
      %452 = vmatprep.subr.mxu0 0.0
      %453 = vmatpush2.xpose.msra.mxu0 0.0
      %454 = vmatprep.subr.mxu0 0.0
      %455 = vmatpush2.xpose.msra.mxu0 0.0
      %456 = vmatprep.subr.mxu0 0.0
      %457 = vmatpush2.xpose.msra.mxu0 0.0
      %458 = vmatprep.mubr.f32.mxu0 0.0
      %459 = vmatmul.mubr.f32.gmra.mxu0 %v344
      %v460 = vpop.f32.mrf.mxu0
      %v461 = vadd.f32 0.0, %v460
      %v462 = vpop.f32.mrf.mxu0
      %463 = vdwg.mxu0
      %v465 = vsel %vm278, %v230, 0
      %v468 = vsel %vm278, %v231, 0
      %v471 = vsel %vm278, %v232, 0
      %v474 = vsel %vm278, %v233, 0
      %v477 = vsel %vm278, %v234, 0
      %v480 = vsel %vm278, %v235, 0
      %v483 = vsel %vm278, %v236, 0
      %v486 = vsel %vm278, %v237, 0
      %v489 = vsel %vm278, %v238, 0
      %v492 = vsel %vm278, %v239, 0
      %v495 = vsel %vm278, %v240, 0
      %v498 = vsel %vm278, %v241, 0
      %v501 = vsel %vm278, %v242, 0
      %v504 = vsel %vm278, %v243, 0
      %v507 = vsel %vm278, %v244, 0
      %v510 = vsel %vm278, %v245, 0
      %v513 = vsel %vm278, %v246, 0
      %v516 = vsel %vm278, %v247, 0
      %v519 = vsel %vm278, %v248, 0
      %v522 = vsel %vm278, %v249, 0
      %v525 = vsel %vm278, %v250, 0
      %v528 = vsel %vm278, %v251, 0
      %v531 = vsel %vm278, %v252, 0
      %v534 = vsel %vm278, %v253, 0
      %v537 = vsel %vm278, %v254, 0
      %v540 = vsel %vm278, %v255, 0
      %v543 = vsel %vm278, %v256, 0
      %v546 = vsel %vm278, %v257, 0
      %v549 = vsel %vm278, %v258, 0
      %v552 = vsel %vm278, %v259, 0
      %v555 = vsel %vm278, %v260, 0
      %v558 = vsel %vm278, %v261, 0
      %560 = vmatprep.subr.mxu0 0.0
      %561 = vmatpush1.xpose.msra.mxu0 %v558
      %562 = vmatprep.subr.mxu0 0.0
      %563 = vmatpush1.xpose.msra.mxu0 %v555
      %564 = vmatprep.subr.mxu0 0.0
      %565 = vmatpush1.xpose.msra.mxu0 %v552
      %566 = vmatprep.subr.mxu0 0.0
      %567 = vmatpush1.xpose.msra.mxu0 %v549
      %568 = vmatprep.subr.mxu0 0.0
      %569 = vmatpush1.xpose.msra.mxu0 %v546
      %570 = vmatprep.subr.mxu0 0.0
      %571 = vmatpush1.xpose.msra.mxu0 %v543
      %572 = vmatprep.subr.mxu0 0.0
      %573 = vmatpush1.xpose.msra.mxu0 %v540
      %574 = vmatprep.subr.mxu0 0.0
      %575 = vmatpush1.xpose.msra.mxu0 %v537
      %576 = vmatprep.subr.mxu0 0.0
      %577 = vmatpush1.xpose.msra.mxu0 %v534
      %578 = vmatprep.subr.mxu0 0.0
      %579 = vmatpush1.xpose.msra.mxu0 %v531
      %580 = vmatprep.subr.mxu0 0.0
      %581 = vmatpush1.xpose.msra.mxu0 %v528
      %582 = vmatprep.subr.mxu0 0.0
      %583 = vmatpush1.xpose.msra.mxu0 %v525
      %584 = vmatprep.subr.mxu0 0.0
      %585 = vmatpush1.xpose.msra.mxu0 %v522
      %586 = vmatprep.subr.mxu0 0.0
      %587 = vmatpush1.xpose.msra.mxu0 %v519
      %588 = vmatprep.subr.mxu0 0.0
      %589 = vmatpush1.xpose.msra.mxu0 %v516
      %590 = vmatprep.subr.mxu0 0.0
      %591 = vmatpush1.xpose.msra.mxu0 %v513
      %592 = vmatprep.subr.mxu0 0.0
      %593 = vmatpush2.xpose.msra.mxu0 0.0
      %594 = vmatprep.subr.mxu0 0.0
      %595 = vmatpush2.xpose.msra.mxu0 0.0
      %596 = vmatprep.subr.mxu0 0.0
      %597 = vmatpush2.xpose.msra.mxu0 0.0
      %598 = vmatprep.subr.mxu0 0.0
      %599 = vmatpush2.xpose.msra.mxu0 0.0
      %600 = vmatprep.subr.mxu0 0.0
      %601 = vmatpush2.xpose.msra.mxu0 0.0
      %602 = vmatprep.subr.mxu0 0.0
      %603 = vmatpush2.xpose.msra.mxu0 0.0
      %604 = vmatprep.subr.mxu0 0.0
      %605 = vmatpush2.xpose.msra.mxu0 0.0
      %606 = vmatprep.subr.mxu0 0.0
      %607 = vmatpush2.xpose.msra.mxu0 0.0
      %608 = vmatprep.subr.mxu0 0.0
      %609 = vmatpush2.xpose.msra.mxu0 0.0
      %610 = vmatprep.subr.mxu0 0.0
      %611 = vmatpush2.xpose.msra.mxu0 0.0
      %612 = vmatprep.subr.mxu0 0.0
      %613 = vmatpush2.xpose.msra.mxu0 0.0
      %614 = vmatprep.subr.mxu0 0.0
      %615 = vmatpush2.xpose.msra.mxu0 0.0
      %616 = vmatprep.subr.mxu0 0.0
      %617 = vmatpush2.xpose.msra.mxu0 0.0
      %618 = vmatprep.subr.mxu0 0.0
      %619 = vmatpush2.xpose.msra.mxu0 0.0
      %620 = vmatprep.subr.mxu0 0.0
      %621 = vmatpush2.xpose.msra.mxu0 0.0
      %622 = vmatprep.subr.mxu0 0.0
      %623 = vmatpush2.xpose.msra.mxu0 0.0
      %624 = vmatprep.mubr.f32.mxu0 0.0
      %625 = vmatmul.mubr.f32.gmra.mxu0 %v465
      %v626 = vpop.f32.mrf.mxu0
      %v627 = vadd.f32 0.0, %v626
      %v628 = vpop.f32.mrf.mxu0
      %629 = vmatprep.mubr.f32.mxu0 0.0
      %630 = vmatmul.mubr.f32.gmra.mxu0 %v468
      %v631 = vpop.f32.mrf.mxu0
      %v632 = vadd.f32 0.0, %v631
      %v633 = vpop.f32.mrf.mxu0
      %634 = vmatprep.mubr.f32.mxu0 0.0
      %635 = vmatmul.mubr.f32.gmra.mxu0 %v471
      %v636 = vpop.f32.mrf.mxu0
      %v637 = vadd.f32 0.0, %v636
      %v638 = vpop.f32.mrf.mxu0
      %639 = vmatprep.mubr.f32.mxu0 0.0
      %640 = vmatmul.mubr.f32.gmra.mxu0 %v474
      %v641 = vpop.f32.mrf.mxu0
      %v642 = vadd.f32 0.0, %v641
      %v643 = vpop.f32.mrf.mxu0
      %644 = vmatprep.mubr.f32.mxu0 0.0
      %645 = vmatmul.mubr.f32.gmra.mxu0 %v477
      %v646 = vpop.f32.mrf.mxu0
      %v647 = vadd.f32 0.0, %v646
      %v648 = vpop.f32.mrf.mxu0
      %649 = vmatprep.mubr.f32.mxu0 0.0
      %650 = vmatmul.mubr.f32.gmra.mxu0 %v480
      %v651 = vpop.f32.mrf.mxu0
      %v652 = vadd.f32 0.0, %v651
      %v653 = vpop.f32.mrf.mxu0
      %654 = vmatprep.mubr.f32.mxu0 0.0
      %655 = vmatmul.mubr.f32.gmra.mxu0 %v483
      %v656 = vpop.f32.mrf.mxu0
      %v657 = vadd.f32 0.0, %v656
      %v658 = vpop.f32.mrf.mxu0
      %659 = vmatprep.mubr.f32.mxu0 0.0
      %660 = vmatmul.mubr.f32.gmra.mxu0 %v486
      %v661 = vpop.f32.mrf.mxu0
      %v662 = vadd.f32 0.0, %v661
      %v663 = vpop.f32.mrf.mxu0
      %664 = vmatprep.mubr.f32.mxu0 0.0
      %665 = vmatmul.mubr.f32.gmra.mxu0 %v489
      %v666 = vpop.f32.mrf.mxu0
      %v667 = vadd.f32 0.0, %v666
      %v668 = vpop.f32.mrf.mxu0
      %669 = vmatprep.mubr.f32.mxu0 0.0
      %670 = vmatmul.mubr.f32.gmra.mxu0 %v492
      %v671 = vpop.f32.mrf.mxu0
      %v672 = vadd.f32 0.0, %v671
      %v673 = vpop.f32.mrf.mxu0
      %674 = vmatprep.mubr.f32.mxu0 0.0
      %675 = vmatmul.mubr.f32.gmra.mxu0 %v495
      %v676 = vpop.f32.mrf.mxu0
      %v677 = vadd.f32 0.0, %v676
      %v678 = vpop.f32.mrf.mxu0
      %679 = vmatprep.mubr.f32.mxu0 0.0
      %680 = vmatmul.mubr.f32.gmra.mxu0 %v498
      %v681 = vpop.f32.mrf.mxu0
      %v682 = vadd.f32 0.0, %v681
      %v683 = vpop.f32.mrf.mxu0
      %684 = vmatprep.mubr.f32.mxu0 0.0
      %685 = vmatmul.mubr.f32.gmra.mxu0 %v501
      %v686 = vpop.f32.mrf.mxu0
      %v687 = vadd.f32 0.0, %v686
      %v688 = vpop.f32.mrf.mxu0
      %689 = vmatprep.mubr.f32.mxu0 0.0
      %690 = vmatmul.mubr.f32.gmra.mxu0 %v504
      %v691 = vpop.f32.mrf.mxu0
      %v692 = vadd.f32 0.0, %v691
      %v693 = vpop.f32.mrf.mxu0
      %694 = vmatprep.mubr.f32.mxu0 0.0
      %695 = vmatmul.mubr.f32.gmra.mxu0 %v507
      %v696 = vpop.f32.mrf.mxu0
      %v697 = vadd.f32 0.0, %v696
      %v698 = vpop.f32.mrf.mxu0
      %699 = vmatprep.mubr.f32.mxu0 0.0
      %700 = vmatmul.mubr.f32.gmra.mxu0 %v510
      %v701 = vpop.f32.mrf.mxu0
      %v702 = vadd.f32 0.0, %v701
      %v703 = vpop.f32.mrf.mxu0
      %704 = vdwg.mxu0
      %v705 = vlaneseq
      %v706 = vshrl.u32 %v705, 7
      %v707 = vsub.s32 0, %v706
      %v708 = vrot.slane %v461, %v707
      %v709 = vadd.f32 %v281, %v708
      %v710 = vadd.f32 %v284, %v708
      %v711 = vadd.f32 %v287, %v708
      %v712 = vadd.f32 %v290, %v708
      %v713 = vadd.f32 %v293, %v708
      %v714 = vadd.f32 %v296, %v708
      %v715 = vadd.f32 %v299, %v708
      %v716 = vadd.f32 %v302, %v708
      %v717 = vadd.f32 %v305, %v708
      %v718 = vadd.f32 %v308, %v708
      %v719 = vadd.f32 %v311, %v708
      %v720 = vadd.f32 %v314, %v708
      %v721 = vadd.f32 %v317, %v708
      %v722 = vadd.f32 %v320, %v708
      %v723 = vadd.f32 %v323, %v708
      %v724 = vadd.f32 %v326, %v708
      %v725 = vmul.f32 %v627, 2.0
      %v726 = vmul.f32 %v632, 2.0
      %v727 = vmul.f32 %v637, 2.0
      %v728 = vmul.f32 %v642, 2.0
      %v729 = vmul.f32 %v647, 2.0
      %v730 = vmul.f32 %v652, 2.0
      %v731 = vmul.f32 %v657, 2.0
      %v732 = vmul.f32 %v662, 2.0
      %v733 = vmul.f32 %v667, 2.0
      %v734 = vmul.f32 %v672, 2.0
      %v735 = vmul.f32 %v677, 2.0
      %v736 = vmul.f32 %v682, 2.0
      %v737 = vmul.f32 %v687, 2.0
      %v738 = vmul.f32 %v692, 2.0
      %v739 = vmul.f32 %v697, 2.0
      %v740 = vmul.f32 %v702, 2.0
      %v741 = vsub.f32 %v709, %v725
      %v742 = vsub.f32 %v710, %v726
      %v743 = vsub.f32 %v711, %v727
      %v744 = vsub.f32 %v712, %v728
      %v745 = vsub.f32 %v713, %v729
      %v746 = vsub.f32 %v714, %v730
      %v747 = vsub.f32 %v715, %v731
      %v748 = vsub.f32 %v716, %v732
      %v749 = vsub.f32 %v717, %v733
      %v750 = vsub.f32 %v718, %v734
      %v751 = vsub.f32 %v719, %v735
      %v752 = vsub.f32 %v720, %v736
      %v753 = vsub.f32 %v721, %v737
      %v754 = vsub.f32 %v722, %v738
      %v755 = vsub.f32 %v723, %v739
      %v756 = vsub.f32 %v724, %v740
      %v757 = vadd.f32 %v741, 0.0001
      %v758 = vadd.f32 %v742, 0.0001
      %v759 = vadd.f32 %v743, 0.0001
      %v760 = vadd.f32 %v744, 0.0001
      %v761 = vadd.f32 %v745, 0.0001
      %v762 = vadd.f32 %v746, 0.0001
      %v763 = vadd.f32 %v747, 0.0001
      %v764 = vadd.f32 %v748, 0.0001
      %v765 = vadd.f32 %v749, 0.0001
      %v766 = vadd.f32 %v750, 0.0001
      %v767 = vadd.f32 %v751, 0.0001
      %v768 = vadd.f32 %v752, 0.0001
      %v769 = vadd.f32 %v753, 0.0001
      %v770 = vadd.f32 %v754, 0.0001
      %v771 = vadd.f32 %v755, 0.0001
      %v772 = vadd.f32 %v756, 0.0001
      %s773 = smul.u32 %s18, 128
      %v774 = vlaneseq
      %v775 = vshrl.u32 %v774, 7
      %v776 = vadd.s32 %v775, 8
      %v777 = vadd.s32 %v775, 16
      %v778 = vadd.s32 %v775, 24
      %v779 = vadd.s32 %v775, 32
      %v780 = vadd.s32 %v775, 40
      %v781 = vadd.s32 %v775, 48
      %v782 = vadd.s32 %v775, 56
      %v783 = vadd.s32 %v775, 64
      %v784 = vadd.s32 %v775, 72
      %v785 = vadd.s32 %v775, 80
      %v786 = vadd.s32 %v775, 88
      %v787 = vadd.s32 %v775, 96
      %v788 = vadd.s32 %v775, 104
      %v789 = vadd.s32 %v775, 112
      %v790 = vadd.s32 %v775, 120
      %v791 = vstv %s773
      %v792 = vadd.s32 %v791, %v775
      %v793 = vadd.s32 %v791, %v776
      %v794 = vadd.s32 %v791, %v777
      %v795 = vadd.s32 %v791, %v778
      %v796 = vadd.s32 %v791, %v779
      %v797 = vadd.s32 %v791, %v780
      %v798 = vadd.s32 %v791, %v781
      %v799 = vadd.s32 %v791, %v782
      %v800 = vadd.s32 %v791, %v783
      %v801 = vadd.s32 %v791, %v784
      %v802 = vadd.s32 %v791, %v785
      %v803 = vadd.s32 %v791, %v786
      %v804 = vadd.s32 %v791, %v787
      %v805 = vadd.s32 %v791, %v788
      %v806 = vadd.s32 %v791, %v789
      %v807 = vadd.s32 %v791, %v790
      %s808 = smul.u32 %s19, 128
      %v809 = vlaneseq
      %v810 = vand.u32 %v809, 127
      %v811 = vstv %s808
      %v812 = vadd.s32 %v811, %v810
      %vm813 = vcmp.eq.s32.totalorder %v792, %v812
      %vm814 = vcmp.eq.s32.totalorder %v793, %v812
      %vm815 = vcmp.eq.s32.totalorder %v794, %v812
      %vm816 = vcmp.eq.s32.totalorder %v795, %v812
      %vm817 = vcmp.eq.s32.totalorder %v796, %v812
      %vm818 = vcmp.eq.s32.totalorder %v797, %v812
      %vm819 = vcmp.eq.s32.totalorder %v798, %v812
      %vm820 = vcmp.eq.s32.totalorder %v799, %v812
      %vm821 = vcmp.eq.s32.totalorder %v800, %v812
      %vm822 = vcmp.eq.s32.totalorder %v801, %v812
      %vm823 = vcmp.eq.s32.totalorder %v802, %v812
      %vm824 = vcmp.eq.s32.totalorder %v803, %v812
      %vm825 = vcmp.eq.s32.totalorder %v804, %v812
      %vm826 = vcmp.eq.s32.totalorder %v805, %v812
      %vm827 = vcmp.eq.s32.totalorder %v806, %v812
      %vm828 = vcmp.eq.s32.totalorder %v807, %v812
      %vm829 = vcmp.lt.s32.totalorder %v812, 300
      %vm830 = vcmp.lt.f32.partialorder %v757, 6.399984e-05
      %vm831 = vcmp.lt.f32.partialorder %v758, 6.399984e-05
      %vm832 = vcmp.lt.f32.partialorder %v759, 6.399984e-05
      %vm833 = vcmp.lt.f32.partialorder %v760, 6.399984e-05
      %vm834 = vcmp.lt.f32.partialorder %v761, 6.399984e-05
      %vm835 = vcmp.lt.f32.partialorder %v762, 6.399984e-05
      %vm836 = vcmp.lt.f32.partialorder %v763, 6.399984e-05
      %vm837 = vcmp.lt.f32.partialorder %v764, 6.399984e-05
      %vm838 = vcmp.lt.f32.partialorder %v765, 6.399984e-05
      %vm839 = vcmp.lt.f32.partialorder %v766, 6.399984e-05
      %vm840 = vcmp.lt.f32.partialorder %v767, 6.399984e-05
      %vm841 = vcmp.lt.f32.partialorder %v768, 6.399984e-05
      %vm842 = vcmp.lt.f32.partialorder %v769, 6.399984e-05
      %vm843 = vcmp.lt.f32.partialorder %v770, 6.399984e-05
      %vm844 = vcmp.lt.f32.partialorder %v771, 6.399984e-05
      %vm845 = vcmp.lt.f32.partialorder %v772, 6.399984e-05
      %vm846 = vmor %vm813, %vm830
      %vm847 = vmor %vm814, %vm831
      %vm848 = vmor %vm815, %vm832
      %vm849 = vmor %vm816, %vm833
      %vm850 = vmor %vm817, %vm834
      %vm851 = vmor %vm818, %vm835
      %vm852 = vmor %vm819, %vm836
      %vm853 = vmor %vm820, %vm837
      %vm854 = vmor %vm821, %vm838
      %vm855 = vmor %vm822, %vm839
      %vm856 = vmor %vm823, %vm840
      %vm857 = vmor %vm824, %vm841
      %vm858 = vmor %vm825, %vm842
      %vm859 = vmor %vm826, %vm843
      %vm860 = vmor %vm827, %vm844
      %vm861 = vmor %vm828, %vm845
      %vm862 = vmxor %vm846, 1
      %vm863 = vmxor %vm847, 1
      %vm864 = vmxor %vm848, 1
      %vm865 = vmxor %vm849, 1
      %vm866 = vmxor %vm850, 1
      %vm867 = vmxor %vm851, 1
      %vm868 = vmxor %vm852, 1
      %vm869 = vmxor %vm853, 1
      %vm870 = vmxor %vm854, 1
      %vm871 = vmxor %vm855, 1
      %vm872 = vmxor %vm856, 1
      %vm873 = vmxor %vm857, 1
      %vm874 = vmxor %vm858, 1
      %vm875 = vmxor %vm859, 1
      %vm876 = vmxor %vm860, 1
      %vm877 = vmxor %vm861, 1
      %vm878 = vmand %vm829, %vm862
      %vm879 = vmand %vm829, %vm863
      %vm880 = vmand %vm829, %vm864
      %vm881 = vmand %vm829, %vm865
      %vm882 = vmand %vm829, %vm866
      %vm883 = vmand %vm829, %vm867
      %vm884 = vmand %vm829, %vm868
      %vm885 = vmand %vm829, %vm869
      %vm886 = vmand %vm829, %vm870
      %vm887 = vmand %vm829, %vm871
      %vm888 = vmand %vm829, %vm872
      %vm889 = vmand %vm829, %vm873
      %vm890 = vmand %vm829, %vm874
      %vm891 = vmand %vm829, %vm875
      %vm892 = vmand %vm829, %vm876
      %vm893 = vmand %vm829, %vm877
      %v894 = vsel %vm878, %v757, inf
      %v895 = vsel %vm879, %v758, inf
      %v896 = vsel %vm880, %v759, inf
      %v897 = vsel %vm881, %v760, inf
      %v898 = vsel %vm882, %v761, inf
      %v899 = vsel %vm883, %v762, inf
      %v900 = vsel %vm884, %v763, inf
      %v901 = vsel %vm885, %v764, inf
      %v902 = vsel %vm886, %v765, inf
      %v903 = vsel %vm887, %v766, inf
      %v904 = vsel %vm888, %v767, inf
      %v905 = vsel %vm889, %v768, inf
      %v906 = vsel %vm890, %v769, inf
      %v907 = vsel %vm891, %v770, inf
      %v908 = vsel %vm892, %v771, inf
      %v909 = vsel %vm893, %v772, inf
      %910 = vmin.xlane.f32.xlu0 %v894
      %v911 = vpop.xlane.xlu0 %910
      %912 = vmin.xlane.f32.xlu0 %v895
      %v913 = vpop.xlane.xlu0 %912
      %914 = vmin.xlane.f32.xlu0 %v896
      %v915 = vpop.xlane.xlu0 %914
      %916 = vmin.xlane.f32.xlu0 %v897
      %v917 = vpop.xlane.xlu0 %916
      %918 = vmin.xlane.f32.xlu0 %v898
      %v919 = vpop.xlane.xlu0 %918
      %920 = vmin.xlane.f32.xlu0 %v899
      %v921 = vpop.xlane.xlu0 %920
      %922 = vmin.xlane.f32.xlu0 %v900
      %v923 = vpop.xlane.xlu0 %922
      %924 = vmin.xlane.f32.xlu0 %v901
      %v925 = vpop.xlane.xlu0 %924
      %926 = vmin.xlane.f32.xlu0 %v902
      %v927 = vpop.xlane.xlu0 %926
      %928 = vmin.xlane.f32.xlu0 %v903
      %v929 = vpop.xlane.xlu0 %928
      %930 = vmin.xlane.f32.xlu0 %v904
      %v931 = vpop.xlane.xlu0 %930
      %932 = vmin.xlane.f32.xlu0 %v905
      %v933 = vpop.xlane.xlu0 %932
      %934 = vmin.xlane.f32.xlu0 %v906
      %v935 = vpop.xlane.xlu0 %934
      %936 = vmin.xlane.f32.xlu0 %v907
      %v937 = vpop.xlane.xlu0 %936
      %938 = vmin.xlane.f32.xlu0 %v908
      %v939 = vpop.xlane.xlu0 %938
      %940 = vmin.xlane.f32.xlu0 %v909
      %v941 = vpop.xlane.xlu0 %940
      %vm942 = vmand %vm829, %vm846
      %vm943 = vmand %vm829, %vm847
      %vm944 = vmand %vm829, %vm848
      %vm945 = vmand %vm829, %vm849
      %vm946 = vmand %vm829, %vm850
      %vm947 = vmand %vm829, %vm851
      %vm948 = vmand %vm829, %vm852
      %vm949 = vmand %vm829, %vm853
      %vm950 = vmand %vm829, %vm854
      %vm951 = vmand %vm829, %vm855
      %vm952 = vmand %vm829, %vm856
      %vm953 = vmand %vm829, %vm857
      %vm954 = vmand %vm829, %vm858
      %vm955 = vmand %vm829, %vm859
      %vm956 = vmand %vm829, %vm860
      %vm957 = vmand %vm829, %vm861
      %v958 = vsel %vm942, %v757, inf
      %v959 = vsel %vm943, %v758, inf
      %v960 = vsel %vm944, %v759, inf
      %v961 = vsel %vm945, %v760, inf
      %v962 = vsel %vm946, %v761, inf
      %v963 = vsel %vm947, %v762, inf
      %v964 = vsel %vm948, %v763, inf
      %v965 = vsel %vm949, %v764, inf
      %v966 = vsel %vm950, %v765, inf
      %v967 = vsel %vm951, %v766, inf
      %v968 = vsel %vm952, %v767, inf
      %v969 = vsel %vm953, %v768, inf
      %v970 = vsel %vm954, %v769, inf
      %v971 = vsel %vm955, %v770, inf
      %v972 = vsel %vm956, %v771, inf
      %v973 = vsel %vm957, %v772, inf
      %974 = vmin.xlane.f32.xlu0 %v958
      %v975 = vpop.xlane.xlu0 %974
      %976 = vmin.xlane.f32.xlu0 %v959
      %v977 = vpop.xlane.xlu0 %976
      %978 = vmin.xlane.f32.xlu0 %v960
      %v979 = vpop.xlane.xlu0 %978
      %980 = vmin.xlane.f32.xlu0 %v961
      %v981 = vpop.xlane.xlu0 %980
      %982 = vmin.xlane.f32.xlu0 %v962
      %v983 = vpop.xlane.xlu0 %982
      %984 = vmin.xlane.f32.xlu0 %v963
      %v985 = vpop.xlane.xlu0 %984
      %986 = vmin.xlane.f32.xlu0 %v964
      %v987 = vpop.xlane.xlu0 %986
      %988 = vmin.xlane.f32.xlu0 %v965
      %v989 = vpop.xlane.xlu0 %988
      %990 = vmin.xlane.f32.xlu0 %v966
      %v991 = vpop.xlane.xlu0 %990
      %992 = vmin.xlane.f32.xlu0 %v967
      %v993 = vpop.xlane.xlu0 %992
      %994 = vmin.xlane.f32.xlu0 %v968
      %v995 = vpop.xlane.xlu0 %994
      %996 = vmin.xlane.f32.xlu0 %v969
      %v997 = vpop.xlane.xlu0 %996
      %998 = vmin.xlane.f32.xlu0 %v970
      %v999 = vpop.xlane.xlu0 %998
      %1000 = vmin.xlane.f32.xlu0 %v971
      %v1001 = vpop.xlane.xlu0 %1000
      %1002 = vmin.xlane.f32.xlu0 %v972
      %v1003 = vpop.xlane.xlu0 %1002
      %1004 = vmin.xlane.f32.xlu0 %v973
      %v1005 = vpop.xlane.xlu0 %1004
      %p1006 = scmp.eq.s32.totalorder %s19, 0
      // Predicated region
      $region33: #{tpu_custom_call.1} parent=31 // pred_check
        %p1007 = pneg %p1006
      $region34: #{tpu_custom_call.1} parent=31 // pred_check_branch
        %1009 = sbr.rel (%p1007) target = $region36
      $region35: #{tpu_custom_call.1} parent=31 // pred_region
        %vm1010 = vcmask 7168
        %1011 = vst.msk [vmem:[#allocation2] sm:$0xff] %vm1010, %v911
        %1012 = vst.msk [vmem:[#allocation2 + $0x8] sm:$0xff] %vm1010, %v913
        %1013 = vst.msk [vmem:[#allocation2 + $0x10] sm:$0xff] %vm1010, %v915
        %1014 = vst.msk [vmem:[#allocation2 + $0x18] sm:$0xff] %vm1010, %v917
        %1015 = vst.msk [vmem:[#allocation2 + $0x20] sm:$0xff] %vm1010, %v919
        %1016 = vst.msk [vmem:[#allocation2 + $0x28] sm:$0xff] %vm1010, %v921
        %1017 = vst.msk [vmem:[#allocation2 + $0x30] sm:$0xff] %vm1010, %v923
        %1018 = vst.msk [vmem:[#allocation2 + $0x38] sm:$0xff] %vm1010, %v925
        %1019 = vst.msk [vmem:[#allocation2 + $0x40] sm:$0xff] %vm1010, %v927
        %1020 = vst.msk [vmem:[#allocation2 + $0x48] sm:$0xff] %vm1010, %v929
        %1021 = vst.msk [vmem:[#allocation2 + $0x50] sm:$0xff] %vm1010, %v931
        %1022 = vst.msk [vmem:[#allocation2 + $0x58] sm:$0xff] %vm1010, %v933
        %1023 = vst.msk [vmem:[#allocation2 + $0x60] sm:$0xff] %vm1010, %v935
        %1024 = vst.msk [vmem:[#allocation2 + $0x68] sm:$0xff] %vm1010, %v937
        %1025 = vst.msk [vmem:[#allocation2 + $0x70] sm:$0xff] %vm1010, %v939
        %1026 = vst.msk [vmem:[#allocation2 + $0x78] sm:$0xff] %vm1010, %v941
        %1027 = vst.msk [vmem:[#allocation3] sm:$0xff] %vm1010, %v975
        %1028 = vst.msk [vmem:[#allocation3 + $0x8] sm:$0xff] %vm1010, %v977
        %1029 = vst.msk [vmem:[#allocation3 + $0x10] sm:$0xff] %vm1010, %v979
        %1030 = vst.msk [vmem:[#allocation3 + $0x18] sm:$0xff] %vm1010, %v981
        %1031 = vst.msk [vmem:[#allocation3 + $0x20] sm:$0xff] %vm1010, %v983
        %1032 = vst.msk [vmem:[#allocation3 + $0x28] sm:$0xff] %vm1010, %v985
        %1033 = vst.msk [vmem:[#allocation3 + $0x30] sm:$0xff] %vm1010, %v987
        %1034 = vst.msk [vmem:[#allocation3 + $0x38] sm:$0xff] %vm1010, %v989
        %1035 = vst.msk [vmem:[#allocation3 + $0x40] sm:$0xff] %vm1010, %v991
        %1036 = vst.msk [vmem:[#allocation3 + $0x48] sm:$0xff] %vm1010, %v993
        %1037 = vst.msk [vmem:[#allocation3 + $0x50] sm:$0xff] %vm1010, %v995
        %1038 = vst.msk [vmem:[#allocation3 + $0x58] sm:$0xff] %vm1010, %v997
        %1039 = vst.msk [vmem:[#allocation3 + $0x60] sm:$0xff] %vm1010, %v999
        %1040 = vst.msk [vmem:[#allocation3 + $0x68] sm:$0xff] %vm1010, %v1001
        %1041 = vst.msk [vmem:[#allocation3 + $0x70] sm:$0xff] %vm1010, %v1003
        %1042 = vst.msk [vmem:[#allocation3 + $0x78] sm:$0xff] %vm1010, %v1005
        %v1043 = vld [vmem:[%s222] sm:$0xff]
        %v1044 = vld [vmem:[%s222 + $0x8] sm:$0xff]
        %v1045 = vld [vmem:[%s222 + $0x10] sm:$0xff]
        %v1046 = vld [vmem:[%s222 + $0x18] sm:$0xff]
        %v1047 = vld [vmem:[%s222 + $0x20] sm:$0xff]
        %v1048 = vld [vmem:[%s222 + $0x28] sm:$0xff]
        %v1049 = vld [vmem:[%s222 + $0x30] sm:$0xff]
        %v1050 = vld [vmem:[%s222 + $0x38] sm:$0xff]
        %v1051 = vld [vmem:[%s222 + $0x40] sm:$0xff]
        %v1052 = vld [vmem:[%s222 + $0x48] sm:$0xff]
        %v1053 = vld [vmem:[%s222 + $0x50] sm:$0xff]
        %v1054 = vld [vmem:[%s222 + $0x58] sm:$0xff]
        %v1055 = vld [vmem:[%s222 + $0x60] sm:$0xff]
        %v1056 = vld [vmem:[%s222 + $0x68] sm:$0xff]
        %v1057 = vld [vmem:[%s222 + $0x70] sm:$0xff]
        %v1058 = vld [vmem:[%s222 + $0x78] sm:$0xff]
        %v1059 = vmul.f32 %v1043, %v1043
        %v1060 = vmul.f32 %v1044, %v1044
        %v1061 = vmul.f32 %v1045, %v1045
        %v1062 = vmul.f32 %v1046, %v1046
        %v1063 = vmul.f32 %v1047, %v1047
        %v1064 = vmul.f32 %v1048, %v1048
        %v1065 = vmul.f32 %v1049, %v1049
        %v1066 = vmul.f32 %v1050, %v1050
        %v1067 = vmul.f32 %v1051, %v1051
        %v1068 = vmul.f32 %v1052, %v1052
        %v1069 = vmul.f32 %v1053, %v1053
        %v1070 = vmul.f32 %v1054, %v1054
        %v1071 = vmul.f32 %v1055, %v1055
        %v1072 = vmul.f32 %v1056, %v1056
        %v1073 = vmul.f32 %v1057, %v1057
        %v1074 = vmul.f32 %v1058, %v1058
        %v1075 = vsel %vm278, %v1059, 0.0
        %1076 = vadd.xlane.f32.xlu0 %v1075
        %v1077 = vpop.xlane.xlu0 %1076
        %v1078 = vsel %vm278, %v1060, 0.0
        %1079 = vadd.xlane.f32.xlu0 %v1078
        %v1080 = vpop.xlane.xlu0 %1079
        %v1081 = vsel %vm278, %v1061, 0.0
        %1082 = vadd.xlane.f32.xlu0 %v1081
        %v1083 = vpop.xlane.xlu0 %1082
        %v1084 = vsel %vm278, %v1062, 0.0
        %1085 = vadd.xlane.f32.xlu0 %v1084
        %v1086 = vpop.xlane.xlu0 %1085
        %v1087 = vsel %vm278, %v1063, 0.0
        %1088 = vadd.xlane.f32.xlu0 %v1087
        %v1089 = vpop.xlane.xlu0 %1088
        %v1090 = vsel %vm278, %v1064, 0.0
        %1091 = vadd.xlane.f32.xlu0 %v1090
        %v1092 = vpop.xlane.xlu0 %1091
        %v1093 = vsel %vm278, %v1065, 0.0
        %1094 = vadd.xlane.f32.xlu0 %v1093
        %v1095 = vpop.xlane.xlu0 %1094
        %v1096 = vsel %vm278, %v1066, 0.0
        %1097 = vadd.xlane.f32.xlu0 %v1096
        %v1098 = vpop.xlane.xlu0 %1097
        %v1099 = vsel %vm278, %v1067, 0.0
        %1100 = vadd.xlane.f32.xlu0 %v1099
        %v1101 = vpop.xlane.xlu0 %1100
        %v1102 = vsel %vm278, %v1068, 0.0
        %1103 = vadd.xlane.f32.xlu0 %v1102
        %v1104 = vpop.xlane.xlu0 %1103
        %v1105 = vsel %vm278, %v1069, 0.0
        %1106 = vadd.xlane.f32.xlu0 %v1105
        %v1107 = vpop.xlane.xlu0 %1106
        %v1108 = vsel %vm278, %v1070, 0.0
        %1109 = vadd.xlane.f32.xlu0 %v1108
        %v1110 = vpop.xlane.xlu0 %1109
        %v1111 = vsel %vm278, %v1071, 0.0
        %1112 = vadd.xlane.f32.xlu0 %v1111
        %v1113 = vpop.xlane.xlu0 %1112
        %v1114 = vsel %vm278, %v1072, 0.0
        %1115 = vadd.xlane.f32.xlu0 %v1114
        %v1116 = vpop.xlane.xlu0 %1115
        %v1117 = vsel %vm278, %v1073, 0.0
        %1118 = vadd.xlane.f32.xlu0 %v1117
        %v1119 = vpop.xlane.xlu0 %1118
        %v1120 = vsel %vm278, %v1074, 0.0
        %1121 = vadd.xlane.f32.xlu0 %v1120
        %v1122 = vpop.xlane.xlu0 %1121
        %v1123 = vmul.f32 %v230, %v1043
        %v1124 = vmul.f32 %v231, %v1044
        %v1125 = vmul.f32 %v232, %v1045
        %v1126 = vmul.f32 %v233, %v1046
        %v1127 = vmul.f32 %v234, %v1047
        %v1128 = vmul.f32 %v235, %v1048
        %v1129 = vmul.f32 %v236, %v1049
        %v1130 = vmul.f32 %v237, %v1050
        %v1131 = vmul.f32 %v238, %v1051
        %v1132 = vmul.f32 %v239, %v1052
        %v1133 = vmul.f32 %v240, %v1053
        %v1134 = vmul.f32 %v241, %v1054
        %v1135 = vmul.f32 %v242, %v1055
        %v1136 = vmul.f32 %v243, %v1056
        %v1137 = vmul.f32 %v244, %v1057
        %v1138 = vmul.f32 %v245, %v1058
        %v1139 = vsel %vm278, %v1123, 0.0
        %1140 = vadd.xlane.f32.xlu0 %v1139
        %v1141 = vpop.xlane.xlu0 %1140
        %v1142 = vsel %vm278, %v1124, 0.0
        %1143 = vadd.xlane.f32.xlu0 %v1142
        %v1144 = vpop.xlane.xlu0 %1143
        %v1145 = vsel %vm278, %v1125, 0.0
        %1146 = vadd.xlane.f32.xlu0 %v1145
        %v1147 = vpop.xlane.xlu0 %1146
        %v1148 = vsel %vm278, %v1126, 0.0
        %1149 = vadd.xlane.f32.xlu0 %v1148
        %v1150 = vpop.xlane.xlu0 %1149
        %v1151 = vsel %vm278, %v1127, 0.0
        %1152 = vadd.xlane.f32.xlu0 %v1151
        %v1153 = vpop.xlane.xlu0 %1152
        %v1154 = vsel %vm278, %v1128, 0.0
        %1155 = vadd.xlane.f32.xlu0 %v1154
        %v1156 = vpop.xlane.xlu0 %1155
        %v1157 = vsel %vm278, %v1129, 0.0
        %1158 = vadd.xlane.f32.xlu0 %v1157
        %v1159 = vpop.xlane.xlu0 %1158
        %v1160 = vsel %vm278, %v1130, 0.0
        %1161 = vadd.xlane.f32.xlu0 %v1160
        %v1162 = vpop.xlane.xlu0 %1161
        %v1163 = vsel %vm278, %v1131, 0.0
        %1164 = vadd.xlane.f32.xlu0 %v1163
        %v1165 = vpop.xlane.xlu0 %1164
        %v1166 = vsel %vm278, %v1132, 0.0
        %1167 = vadd.xlane.f32.xlu0 %v1166
        %v1168 = vpop.xlane.xlu0 %1167
        %v1169 = vsel %vm278, %v1133, 0.0
        %1170 = vadd.xlane.f32.xlu0 %v1169
        %v1171 = vpop.xlane.xlu0 %1170
        %v1172 = vsel %vm278, %v1134, 0.0
        %1173 = vadd.xlane.f32.xlu0 %v1172
        %v1174 = vpop.xlane.xlu0 %1173
        %v1175 = vsel %vm278, %v1135, 0.0
        %1176 = vadd.xlane.f32.xlu0 %v1175
        %v1177 = vpop.xlane.xlu0 %1176
        %v1178 = vsel %vm278, %v1136, 0.0
        %1179 = vadd.xlane.f32.xlu0 %v1178
        %v1180 = vpop.xlane.xlu0 %1179
        %v1181 = vsel %vm278, %v1137, 0.0
        %1182 = vadd.xlane.f32.xlu0 %v1181
        %v1183 = vpop.xlane.xlu0 %1182
        %v1184 = vsel %vm278, %v1138, 0.0
        %1185 = vadd.xlane.f32.xlu0 %v1184
        %v1186 = vpop.xlane.xlu0 %1185
        %v1187 = vadd.f32 %v281, %v1077
        %v1188 = vadd.f32 %v284, %v1080
        %v1189 = vadd.f32 %v287, %v1083
        %v1190 = vadd.f32 %v290, %v1086
        %v1191 = vadd.f32 %v293, %v1089
        %v1192 = vadd.f32 %v296, %v1092
        %v1193 = vadd.f32 %v299, %v1095
        %v1194 = vadd.f32 %v302, %v1098
        %v1195 = vadd.f32 %v305, %v1101
        %v1196 = vadd.f32 %v308, %v1104
        %v1197 = vadd.f32 %v311, %v1107
        %v1198 = vadd.f32 %v314, %v1110
        %v1199 = vadd.f32 %v317, %v1113
        %v1200 = vadd.f32 %v320, %v1116
        %v1201 = vadd.f32 %v323, %v1119
        %v1202 = vadd.f32 %v326, %v1122
        %v1203 = vmul.f32 %v1141, 2.0
        %v1204 = vmul.f32 %v1144, 2.0
        %v1205 = vmul.f32 %v1147, 2.0
        %v1206 = vmul.f32 %v1150, 2.0
        %v1207 = vmul.f32 %v1153, 2.0
        %v1208 = vmul.f32 %v1156, 2.0
        %v1209 = vmul.f32 %v1159, 2.0
        %v1210 = vmul.f32 %v1162, 2.0
        %v1211 = vmul.f32 %v1165, 2.0
        %v1212 = vmul.f32 %v1168, 2.0
        %v1213 = vmul.f32 %v1171, 2.0
        %v1214 = vmul.f32 %v1174, 2.0
        %v1215 = vmul.f32 %v1177, 2.0
        %v1216 = vmul.f32 %v1180, 2.0
        %v1217 = vmul.f32 %v1183, 2.0
        %v1218 = vmul.f32 %v1186, 2.0
        %v1219 = vsub.f32 %v1187, %v1203
        %v1220 = vsub.f32 %v1188, %v1204
        %v1221 = vsub.f32 %v1189, %v1205
        %v1222 = vsub.f32 %v1190, %v1206
        %v1223 = vsub.f32 %v1191, %v1207
        %v1224 = vsub.f32 %v1192, %v1208
        %v1225 = vsub.f32 %v1193, %v1209
        %v1226 = vsub.f32 %v1194, %v1210
        %v1227 = vsub.f32 %v1195, %v1211
        %v1228 = vsub.f32 %v1196, %v1212
        %v1229 = vsub.f32 %v1197, %v1213
        %v1230 = vsub.f32 %v1198, %v1214
        %v1231 = vsub.f32 %v1199, %v1215
        %v1232 = vsub.f32 %v1200, %v1216
        %v1233 = vsub.f32 %v1201, %v1217
        %v1234 = vsub.f32 %v1202, %v1218
        %v1235 = vadd.f32 %v1219, 0.0001
        %v1236 = vadd.f32 %v1220, 0.0001
        %v1237 = vadd.f32 %v1221, 0.0001
        %v1238 = vadd.f32 %v1222, 0.0001
        %v1239 = vadd.f32 %v1223, 0.0001
        %v1240 = vadd.f32 %v1224, 0.0001
        %v1241 = vadd.f32 %v1225, 0.0001
        %v1242 = vadd.f32 %v1226, 0.0001
        %v1243 = vadd.f32 %v1227, 0.0001
        %v1244 = vadd.f32 %v1228, 0.0001
        %v1245 = vadd.f32 %v1229, 0.0001
        %v1246 = vadd.f32 %v1230, 0.0001
        %v1247 = vadd.f32 %v1231, 0.0001
        %v1248 = vadd.f32 %v1232, 0.0001
        %v1249 = vadd.f32 %v1233, 0.0001
        %v1250 = vadd.f32 %v1234, 0.0001
        %v1251 = vrsqrt.pop %v1235
        %v1252 = vmul.f32 %v1235, %v1251
        %vm1253 = vcmp.eq.f32.partialorder %v1235, inf
        %v1254 = vsel %vm1253, %v1235, %v1252
        %vm1255 = vcmp.eq.f32.partialorder %v1235, 0.0
        %v1256 = vand.u32 %v1235, 2147483648
        %v1257 = vsel %vm1255, %v1256, %v1254
        %v1258 = vrsqrt.pop %v1236
        %v1259 = vmul.f32 %v1236, %v1258
        %vm1260 = vcmp.eq.f32.partialorder %v1236, inf
        %v1261 = vsel %vm1260, %v1236, %v1259
        %vm1262 = vcmp.eq.f32.partialorder %v1236, 0.0
        %v1263 = vand.u32 %v1236, 2147483648
        %v1264 = vsel %vm1262, %v1263, %v1261
        %v1265 = vrsqrt.pop %v1237
        %v1266 = vmul.f32 %v1237, %v1265
        %vm1267 = vcmp.eq.f32.partialorder %v1237, inf
        %v1268 = vsel %vm1267, %v1237, %v1266
        %vm1269 = vcmp.eq.f32.partialorder %v1237, 0.0
        %v1270 = vand.u32 %v1237, 2147483648
        %v1271 = vsel %vm1269, %v1270, %v1268
        %v1272 = vrsqrt.pop %v1238
        %v1273 = vmul.f32 %v1238, %v1272
        %vm1274 = vcmp.eq.f32.partialorder %v1238, inf
        %v1275 = vsel %vm1274, %v1238, %v1273
        %vm1276 = vcmp.eq.f32.partialorder %v1238, 0.0
        %v1277 = vand.u32 %v1238, 2147483648
        %v1278 = vsel %vm1276, %v1277, %v1275
        %v1279 = vrsqrt.pop %v1239
        %v1280 = vmul.f32 %v1239, %v1279
        %vm1281 = vcmp.eq.f32.partialorder %v1239, inf
        %v1282 = vsel %vm1281, %v1239, %v1280
        %vm1283 = vcmp.eq.f32.partialorder %v1239, 0.0
        %v1284 = vand.u32 %v1239, 2147483648
        %v1285 = vsel %vm1283, %v1284, %v1282
        %v1286 = vrsqrt.pop %v1240
        %v1287 = vmul.f32 %v1240, %v1286
        %vm1288 = vcmp.eq.f32.partialorder %v1240, inf
        %v1289 = vsel %vm1288, %v1240, %v1287
        %vm1290 = vcmp.eq.f32.partialorder %v1240, 0.0
        %v1291 = vand.u32 %v1240, 2147483648
        %v1292 = vsel %vm1290, %v1291, %v1289
        %v1293 = vrsqrt.pop %v1241
        %v1294 = vmul.f32 %v1241, %v1293
        %vm1295 = vcmp.eq.f32.partialorder %v1241, inf
        %v1296 = vsel %vm1295, %v1241, %v1294
        %vm1297 = vcmp.eq.f32.partialorder %v1241, 0.0
        %v1298 = vand.u32 %v1241, 2147483648
        %v1299 = vsel %vm1297, %v1298, %v1296
        %v1300 = vrsqrt.pop %v1242
        %v1301 = vmul.f32 %v1242, %v1300
        %vm1302 = vcmp.eq.f32.partialorder %v1242, inf
        %v1303 = vsel %vm1302, %v1242, %v1301
        %vm1304 = vcmp.eq.f32.partialorder %v1242, 0.0
        %v1305 = vand.u32 %v1242, 2147483648
        %v1306 = vsel %vm1304, %v1305, %v1303
        %v1307 = vrsqrt.pop %v1243
        %v1308 = vmul.f32 %v1243, %v1307
        %vm1309 = vcmp.eq.f32.partialorder %v1243, inf
        %v1310 = vsel %vm1309, %v1243, %v1308
        %vm1311 = vcmp.eq.f32.partialorder %v1243, 0.0
        %v1312 = vand.u32 %v1243, 2147483648
        %v1313 = vsel %vm1311, %v1312, %v1310
        %v1314 = vrsqrt.pop %v1244
        %v1315 = vmul.f32 %v1244, %v1314
        %vm1316 = vcmp.eq.f32.partialorder %v1244, inf
        %v1317 = vsel %vm1316, %v1244, %v1315
        %vm1318 = vcmp.eq.f32.partialorder %v1244, 0.0
        %v1319 = vand.u32 %v1244, 2147483648
        %v1320 = vsel %vm1318, %v1319, %v1317
        %v1321 = vrsqrt.pop %v1245
        %v1322 = vmul.f32 %v1245, %v1321
        %vm1323 = vcmp.eq.f32.partialorder %v1245, inf
        %v1324 = vsel %vm1323, %v1245, %v1322
        %vm1325 = vcmp.eq.f32.partialorder %v1245, 0.0
        %v1326 = vand.u32 %v1245, 2147483648
        %v1327 = vsel %vm1325, %v1326, %v1324
        %v1328 = vrsqrt.pop %v1246
        %v1329 = vmul.f32 %v1246, %v1328
        %vm1330 = vcmp.eq.f32.partialorder %v1246, inf
        %v1331 = vsel %vm1330, %v1246, %v1329
        %vm1332 = vcmp.eq.f32.partialorder %v1246, 0.0
        %v1333 = vand.u32 %v1246, 2147483648
        %v1334 = vsel %vm1332, %v1333, %v1331
        %v1335 = vrsqrt.pop %v1247
        %v1336 = vmul.f32 %v1247, %v1335
        %vm1337 = vcmp.eq.f32.partialorder %v1247, inf
        %v1338 = vsel %vm1337, %v1247, %v1336
        %vm1339 = vcmp.eq.f32.partialorder %v1247, 0.0
        %v1340 = vand.u32 %v1247, 2147483648
        %v1341 = vsel %vm1339, %v1340, %v1338
        %v1342 = vrsqrt.pop %v1248
        %v1343 = vmul.f32 %v1248, %v1342
        %vm1344 = vcmp.eq.f32.partialorder %v1248, inf
        %v1345 = vsel %vm1344, %v1248, %v1343
        %vm1346 = vcmp.eq.f32.partialorder %v1248, 0.0
        %v1347 = vand.u32 %v1248, 2147483648
        %v1348 = vsel %vm1346, %v1347, %v1345
        %v1349 = vrsqrt.pop %v1249
        %v1350 = vmul.f32 %v1249, %v1349
        %vm1351 = vcmp.eq.f32.partialorder %v1249, inf
        %v1352 = vsel %vm1351, %v1249, %v1350
        %vm1353 = vcmp.eq.f32.partialorder %v1249, 0.0
        %v1354 = vand.u32 %v1249, 2147483648
        %v1355 = vsel %vm1353, %v1354, %v1352
        %v1356 = vrsqrt.pop %v1250
        %v1357 = vmul.f32 %v1250, %v1356
        %vm1358 = vcmp.eq.f32.partialorder %v1250, inf
        %v1359 = vsel %vm1358, %v1250, %v1357
        %vm1360 = vcmp.eq.f32.partialorder %v1250, 0.0
        %v1361 = vand.u32 %v1250, 2147483648
        %v1362 = vsel %vm1360, %v1361, %v1359
        %v1363 = vadd.f32 %v1257, 1e-08
        %v1364 = vadd.f32 %v1264, 1e-08
        %v1365 = vadd.f32 %v1271, 1e-08
        %v1366 = vadd.f32 %v1278, 1e-08
        %v1367 = vadd.f32 %v1285, 1e-08
        %v1368 = vadd.f32 %v1292, 1e-08
        %v1369 = vadd.f32 %v1299, 1e-08
        %v1370 = vadd.f32 %v1306, 1e-08
        %v1371 = vadd.f32 %v1313, 1e-08
        %v1372 = vadd.f32 %v1320, 1e-08
        %v1373 = vadd.f32 %v1327, 1e-08
        %v1374 = vadd.f32 %v1334, 1e-08
        %v1375 = vadd.f32 %v1341, 1e-08
        %v1376 = vadd.f32 %v1348, 1e-08
        %v1377 = vadd.f32 %v1355, 1e-08
        %v1378 = vadd.f32 %v1362, 1e-08
        %1379 = vst.msk [vmem:[#allocation4] sm:$0xff] %vm1010, %v1363
        %1380 = vst.msk [vmem:[#allocation4 + $0x8] sm:$0xff] %vm1010, %v1364
        %1381 = vst.msk [vmem:[#allocation4 + $0x10] sm:$0xff] %vm1010, %v1365
        %1382 = vst.msk [vmem:[#allocation4 + $0x18] sm:$0xff] %vm1010, %v1366
        %1383 = vst.msk [vmem:[#allocation4 + $0x20] sm:$0xff] %vm1010, %v1367
        %1384 = vst.msk [vmem:[#allocation4 + $0x28] sm:$0xff] %vm1010, %v1368
        %1385 = vst.msk [vmem:[#allocation4 + $0x30] sm:$0xff] %vm1010, %v1369
        %1386 = vst.msk [vmem:[#allocation4 + $0x38] sm:$0xff] %vm1010, %v1370
        %1387 = vst.msk [vmem:[#allocation4 + $0x40] sm:$0xff] %vm1010, %v1371
        %1388 = vst.msk [vmem:[#allocation4 + $0x48] sm:$0xff] %vm1010, %v1372
        %1389 = vst.msk [vmem:[#allocation4 + $0x50] sm:$0xff] %vm1010, %v1373
        %1390 = vst.msk [vmem:[#allocation4 + $0x58] sm:$0xff] %vm1010, %v1374
        %1391 = vst.msk [vmem:[#allocation4 + $0x60] sm:$0xff] %vm1010, %v1375
        %1392 = vst.msk [vmem:[#allocation4 + $0x68] sm:$0xff] %vm1010, %v1376
        %1393 = vst.msk [vmem:[#allocation4 + $0x70] sm:$0xff] %vm1010, %v1377
        %1394 = vst.msk [vmem:[#allocation4 + $0x78] sm:$0xff] %vm1010, %v1378
      $region36: #{tpu_custom_call.1} parent=31 // pred_fallthru
        _
      %p1395 = scmp.gt.s32.totalorder %s19, 0
      // Predicated region
      $region37: #{tpu_custom_call.1} parent=31 // pred_check
        %p1396 = pneg %p1395
      $region38: #{tpu_custom_call.1} parent=31 // pred_check_branch
        %1398 = sbr.rel (%p1396) target = $region40
      $region39: #{tpu_custom_call.1} parent=31 // pred_region
        %v1399 = vld [vmem:[#allocation2] sm:$0xff]
        %v1400 = vld [vmem:[#allocation2 + $0x8] sm:$0xff]
        %v1401 = vld [vmem:[#allocation2 + $0x10] sm:$0xff]
        %v1402 = vld [vmem:[#allocation2 + $0x18] sm:$0xff]
        %v1403 = vld [vmem:[#allocation2 + $0x20] sm:$0xff]
        %v1404 = vld [vmem:[#allocation2 + $0x28] sm:$0xff]
        %v1405 = vld [vmem:[#allocation2 + $0x30] sm:$0xff]
        %v1406 = vld [vmem:[#allocation2 + $0x38] sm:$0xff]
        %v1407 = vld [vmem:[#allocation2 + $0x40] sm:$0xff]
        %v1408 = vld [vmem:[#allocation2 + $0x48] sm:$0xff]
        %v1409 = vld [vmem:[#allocation2 + $0x50] sm:$0xff]
        %v1410 = vld [vmem:[#allocation2 + $0x58] sm:$0xff]
        %v1411 = vld [vmem:[#allocation2 + $0x60] sm:$0xff]
        %v1412 = vld [vmem:[#allocation2 + $0x68] sm:$0xff]
        %v1413 = vld [vmem:[#allocation2 + $0x70] sm:$0xff]
        %v1414 = vld [vmem:[#allocation2 + $0x78] sm:$0xff]
        %v1415 = vmin.f32 %v1399, %v911
        %v1416 = vmin.f32 %v1400, %v913
        %v1417 = vmin.f32 %v1401, %v915
        %v1418 = vmin.f32 %v1402, %v917
        %v1419 = vmin.f32 %v1403, %v919
        %v1420 = vmin.f32 %v1404, %v921
        %v1421 = vmin.f32 %v1405, %v923
        %v1422 = vmin.f32 %v1406, %v925
        %v1423 = vmin.f32 %v1407, %v927
        %v1424 = vmin.f32 %v1408, %v929
        %v1425 = vmin.f32 %v1409, %v931
        %v1426 = vmin.f32 %v1410, %v933
        %v1427 = vmin.f32 %v1411, %v935
        %v1428 = vmin.f32 %v1412, %v937
        %v1429 = vmin.f32 %v1413, %v939
        %v1430 = vmin.f32 %v1414, %v941
        %vm1431 = vcmask 7168
        %1432 = vst.msk [vmem:[#allocation2] sm:$0xff] %vm1431, %v1415
        %1433 = vst.msk [vmem:[#allocation2 + $0x8] sm:$0xff] %vm1431, %v1416
        %1434 = vst.msk [vmem:[#allocation2 + $0x10] sm:$0xff] %vm1431, %v1417
        %1435 = vst.msk [vmem:[#allocation2 + $0x18] sm:$0xff] %vm1431, %v1418
        %1436 = vst.msk [vmem:[#allocation2 + $0x20] sm:$0xff] %vm1431, %v1419
        %1437 = vst.msk [vmem:[#allocation2 + $0x28] sm:$0xff] %vm1431, %v1420
        %1438 = vst.msk [vmem:[#allocation2 + $0x30] sm:$0xff] %vm1431, %v1421
        %1439 = vst.msk [vmem:[#allocation2 + $0x38] sm:$0xff] %vm1431, %v1422
        %1440 = vst.msk [vmem:[#allocation2 + $0x40] sm:$0xff] %vm1431, %v1423
        %1441 = vst.msk [vmem:[#allocation2 + $0x48] sm:$0xff] %vm1431, %v1424
        %1442 = vst.msk [vmem:[#allocation2 + $0x50] sm:$0xff] %vm1431, %v1425
        %1443 = vst.msk [vmem:[#allocation2 + $0x58] sm:$0xff] %vm1431, %v1426
        %1444 = vst.msk [vmem:[#allocation2 + $0x60] sm:$0xff] %vm1431, %v1427
        %1445 = vst.msk [vmem:[#allocation2 + $0x68] sm:$0xff] %vm1431, %v1428
        %1446 = vst.msk [vmem:[#allocation2 + $0x70] sm:$0xff] %vm1431, %v1429
        %1447 = vst.msk [vmem:[#allocation2 + $0x78] sm:$0xff] %vm1431, %v1430
        %v1448 = vld [vmem:[#allocation3] sm:$0xff]
        %v1449 = vld [vmem:[#allocation3 + $0x8] sm:$0xff]
        %v1450 = vld [vmem:[#allocation3 + $0x10] sm:$0xff]
        %v1451 = vld [vmem:[#allocation3 + $0x18] sm:$0xff]
        %v1452 = vld [vmem:[#allocation3 + $0x20] sm:$0xff]
        %v1453 = vld [vmem:[#allocation3 + $0x28] sm:$0xff]
        %v1454 = vld [vmem:[#allocation3 + $0x30] sm:$0xff]
        %v1455 = vld [vmem:[#allocation3 + $0x38] sm:$0xff]
        %v1456 = vld [vmem:[#allocation3 + $0x40] sm:$0xff]
        %v1457 = vld [vmem:[#allocation3 + $0x48] sm:$0xff]
        %v1458 = vld [vmem:[#allocation3 + $0x50] sm:$0xff]
        %v1459 = vld [vmem:[#allocation3 + $0x58] sm:$0xff]
        %v1460 = vld [vmem:[#allocation3 + $0x60] sm:$0xff]
        %v1461 = vld [vmem:[#allocation3 + $0x68] sm:$0xff]
        %v1462 = vld [vmem:[#allocation3 + $0x70] sm:$0xff]
        %v1463 = vld [vmem:[#allocation3 + $0x78] sm:$0xff]
        %v1464 = vmin.f32 %v1448, %v975
        %v1465 = vmin.f32 %v1449, %v977
        %v1466 = vmin.f32 %v1450, %v979
        %v1467 = vmin.f32 %v1451, %v981
        %v1468 = vmin.f32 %v1452, %v983
        %v1469 = vmin.f32 %v1453, %v985
        %v1470 = vmin.f32 %v1454, %v987
        %v1471 = vmin.f32 %v1455, %v989
        %v1472 = vmin.f32 %v1456, %v991
        %v1473 = vmin.f32 %v1457, %v993
        %v1474 = vmin.f32 %v1458, %v995
        %v1475 = vmin.f32 %v1459, %v997
        %v1476 = vmin.f32 %v1460, %v999
        %v1477 = vmin.f32 %v1461, %v1001
        %v1478 = vmin.f32 %v1462, %v1003
        %v1479 = vmin.f32 %v1463, %v1005
        %1480 = vst.msk [vmem:[#allocation3] sm:$0xff] %vm1431, %v1464
        %1481 = vst.msk [vmem:[#allocation3 + $0x8] sm:$0xff] %vm1431, %v1465
        %1482 = vst.msk [vmem:[#allocation3 + $0x10] sm:$0xff] %vm1431, %v1466
        %1483 = vst.msk [vmem:[#allocation3 + $0x18] sm:$0xff] %vm1431, %v1467
        %1484 = vst.msk [vmem:[#allocation3 + $0x20] sm:$0xff] %vm1431, %v1468
        %1485 = vst.msk [vmem:[#allocation3 + $0x28] sm:$0xff] %vm1431, %v1469
        %1486 = vst.msk [vmem:[#allocation3 + $0x30] sm:$0xff] %vm1431, %v1470
        %1487 = vst.msk [vmem:[#allocation3 + $0x38] sm:$0xff] %vm1431, %v1471
        %1488 = vst.msk [vmem:[#allocation3 + $0x40] sm:$0xff] %vm1431, %v1472
        %1489 = vst.msk [vmem:[#allocation3 + $0x48] sm:$0xff] %vm1431, %v1473
        %1490 = vst.msk [vmem:[#allocation3 + $0x50] sm:$0xff] %vm1431, %v1474
        %1491 = vst.msk [vmem:[#allocation3 + $0x58] sm:$0xff] %vm1431, %v1475
        %1492 = vst.msk [vmem:[#allocation3 + $0x60] sm:$0xff] %vm1431, %v1476
        %1493 = vst.msk [vmem:[#allocation3 + $0x68] sm:$0xff] %vm1431, %v1477
        %1494 = vst.msk [vmem:[#allocation3 + $0x70] sm:$0xff] %vm1431, %v1478
        %1495 = vst.msk [vmem:[#allocation3 + $0x78] sm:$0xff] %vm1431, %v1479
      $region40: #{tpu_custom_call.1} parent=31 // pred_fallthru
        _
      %p1496 = scmp.eq.s32.totalorder %s19, 2
      // Predicated region
      $region41: #{tpu_custom_call.1} parent=31 // pred_check
        %p1497 = pneg %p1496
      $region42: #{tpu_custom_call.1} parent=31 // pred_check_branch
        %1499 = sbr.rel (%p1497) target = $region44
      $region43: #{tpu_custom_call.1} parent=31 // pred_region
        %v1500 = vld [vmem:[#allocation2] sm:$0xff]
        %v1501 = vld [vmem:[#allocation2 + $0x8] sm:$0xff]
        %v1502 = vld [vmem:[#allocation2 + $0x10] sm:$0xff]
        %v1503 = vld [vmem:[#allocation2 + $0x18] sm:$0xff]
        %v1504 = vld [vmem:[#allocation2 + $0x20] sm:$0xff]
        %v1505 = vld [vmem:[#allocation2 + $0x28] sm:$0xff]
        %v1506 = vld [vmem:[#allocation2 + $0x30] sm:$0xff]
        %v1507 = vld [vmem:[#allocation2 + $0x38] sm:$0xff]
        %v1508 = vld [vmem:[#allocation2 + $0x40] sm:$0xff]
        %v1509 = vld [vmem:[#allocation2 + $0x48] sm:$0xff]
        %v1510 = vld [vmem:[#allocation2 + $0x50] sm:$0xff]
        %v1511 = vld [vmem:[#allocation2 + $0x58] sm:$0xff]
        %v1512 = vld [vmem:[#allocation2 + $0x60] sm:$0xff]
        %v1513 = vld [vmem:[#allocation2 + $0x68] sm:$0xff]
        %v1514 = vld [vmem:[#allocation2 + $0x70] sm:$0xff]
        %v1515 = vld [vmem:[#allocation2 + $0x78] sm:$0xff]
        %v1516 = vrsqrt.pop %v1500
        %v1517 = vmul.f32 %v1500, %v1516
        %vm1518 = vcmp.eq.f32.partialorder %v1500, inf
        %v1519 = vsel %vm1518, %v1500, %v1517
        %vm1520 = vcmp.eq.f32.partialorder %v1500, 0.0
        %v1521 = vand.u32 %v1500, 2147483648
        %v1522 = vsel %vm1520, %v1521, %v1519
        %v1523 = vrsqrt.pop %v1501
        %v1524 = vmul.f32 %v1501, %v1523
        %vm1525 = vcmp.eq.f32.partialorder %v1501, inf
        %v1526 = vsel %vm1525, %v1501, %v1524
        %vm1527 = vcmp.eq.f32.partialorder %v1501, 0.0
        %v1528 = vand.u32 %v1501, 2147483648
        %v1529 = vsel %vm1527, %v1528, %v1526
        %v1530 = vrsqrt.pop %v1502
        %v1531 = vmul.f32 %v1502, %v1530
        %vm1532 = vcmp.eq.f32.partialorder %v1502, inf
        %v1533 = vsel %vm1532, %v1502, %v1531
        %vm1534 = vcmp.eq.f32.partialorder %v1502, 0.0
        %v1535 = vand.u32 %v1502, 2147483648
        %v1536 = vsel %vm1534, %v1535, %v1533
        %v1537 = vrsqrt.pop %v1503
        %v1538 = vmul.f32 %v1503, %v1537
        %vm1539 = vcmp.eq.f32.partialorder %v1503, inf
        %v1540 = vsel %vm1539, %v1503, %v1538
        %vm1541 = vcmp.eq.f32.partialorder %v1503, 0.0
        %v1542 = vand.u32 %v1503, 2147483648
        %v1543 = vsel %vm1541, %v1542, %v1540
        %v1544 = vrsqrt.pop %v1504
        %v1545 = vmul.f32 %v1504, %v1544
        %vm1546 = vcmp.eq.f32.partialorder %v1504, inf
        %v1547 = vsel %vm1546, %v1504, %v1545
        %vm1548 = vcmp.eq.f32.partialorder %v1504, 0.0
        %v1549 = vand.u32 %v1504, 2147483648
        %v1550 = vsel %vm1548, %v1549, %v1547
        %v1551 = vrsqrt.pop %v1505
        %v1552 = vmul.f32 %v1505, %v1551
        %vm1553 = vcmp.eq.f32.partialorder %v1505, inf
        %v1554 = vsel %vm1553, %v1505, %v1552
        %vm1555 = vcmp.eq.f32.partialorder %v1505, 0.0
        %v1556 = vand.u32 %v1505, 2147483648
        %v1557 = vsel %vm1555, %v1556, %v1554
        %v1558 = vrsqrt.pop %v1506
        %v1559 = vmul.f32 %v1506, %v1558
        %vm1560 = vcmp.eq.f32.partialorder %v1506, inf
        %v1561 = vsel %vm1560, %v1506, %v1559
        %vm1562 = vcmp.eq.f32.partialorder %v1506, 0.0
        %v1563 = vand.u32 %v1506, 2147483648
        %v1564 = vsel %vm1562, %v1563, %v1561
        %v1565 = vrsqrt.pop %v1507
        %v1566 = vmul.f32 %v1507, %v1565
        %vm1567 = vcmp.eq.f32.partialorder %v1507, inf
        %v1568 = vsel %vm1567, %v1507, %v1566
        %vm1569 = vcmp.eq.f32.partialorder %v1507, 0.0
        %v1570 = vand.u32 %v1507, 2147483648
        %v1571 = vsel %vm1569, %v1570, %v1568
        %v1572 = vrsqrt.pop %v1508
        %v1573 = vmul.f32 %v1508, %v1572
        %vm1574 = vcmp.eq.f32.partialorder %v1508, inf
        %v1575 = vsel %vm1574, %v1508, %v1573
        %vm1576 = vcmp.eq.f32.partialorder %v1508, 0.0
        %v1577 = vand.u32 %v1508, 2147483648
        %v1578 = vsel %vm1576, %v1577, %v1575
        %v1579 = vrsqrt.pop %v1509
        %v1580 = vmul.f32 %v1509, %v1579
        %vm1581 = vcmp.eq.f32.partialorder %v1509, inf
        %v1582 = vsel %vm1581, %v1509, %v1580
        %vm1583 = vcmp.eq.f32.partialorder %v1509, 0.0
        %v1584 = vand.u32 %v1509, 2147483648
        %v1585 = vsel %vm1583, %v1584, %v1582
        %v1586 = vrsqrt.pop %v1510
        %v1587 = vmul.f32 %v1510, %v1586
        %vm1588 = vcmp.eq.f32.partialorder %v1510, inf
        %v1589 = vsel %vm1588, %v1510, %v1587
        %vm1590 = vcmp.eq.f32.partialorder %v1510, 0.0
        %v1591 = vand.u32 %v1510, 2147483648
        %v1592 = vsel %vm1590, %v1591, %v1589
        %v1593 = vrsqrt.pop %v1511
        %v1594 = vmul.f32 %v1511, %v1593
        %vm1595 = vcmp.eq.f32.partialorder %v1511, inf
        %v1596 = vsel %vm1595, %v1511, %v1594
        %vm1597 = vcmp.eq.f32.partialorder %v1511, 0.0
        %v1598 = vand.u32 %v1511, 2147483648
        %v1599 = vsel %vm1597, %v1598, %v1596
        %v1600 = vrsqrt.pop %v1512
        %v1601 = vmul.f32 %v1512, %v1600
        %vm1602 = vcmp.eq.f32.partialorder %v1512, inf
        %v1603 = vsel %vm1602, %v1512, %v1601
        %vm1604 = vcmp.eq.f32.partialorder %v1512, 0.0
        %v1605 = vand.u32 %v1512, 2147483648
        %v1606 = vsel %vm1604, %v1605, %v1603
        %v1607 = vrsqrt.pop %v1513
        %v1608 = vmul.f32 %v1513, %v1607
        %vm1609 = vcmp.eq.f32.partialorder %v1513, inf
        %v1610 = vsel %vm1609, %v1513, %v1608
        %vm1611 = vcmp.eq.f32.partialorder %v1513, 0.0
        %v1612 = vand.u32 %v1513, 2147483648
        %v1613 = vsel %vm1611, %v1612, %v1610
        %v1614 = vrsqrt.pop %v1514
        %v1615 = vmul.f32 %v1514, %v1614
        %vm1616 = vcmp.eq.f32.partialorder %v1514, inf
        %v1617 = vsel %vm1616, %v1514, %v1615
        %vm1618 = vcmp.eq.f32.partialorder %v1514, 0.0
        %v1619 = vand.u32 %v1514, 2147483648
        %v1620 = vsel %vm1618, %v1619, %v1617
        %v1621 = vrsqrt.pop %v1515
        %v1622 = vmul.f32 %v1515, %v1621
        %vm1623 = vcmp.eq.f32.partialorder %v1515, inf
        %v1624 = vsel %vm1623, %v1515, %v1622
        %vm1625 = vcmp.eq.f32.partialorder %v1515, 0.0
        %v1626 = vand.u32 %v1515, 2147483648
        %v1627 = vsel %vm1625, %v1626, %v1624
        %v1628 = vadd.f32 %v1522, 1e-08
        %v1629 = vadd.f32 %v1529, 1e-08
        %v1630 = vadd.f32 %v1536, 1e-08
        %v1631 = vadd.f32 %v1543, 1e-08
        %v1632 = vadd.f32 %v1550, 1e-08
        %v1633 = vadd.f32 %v1557, 1e-08
        %v1634 = vadd.f32 %v1564, 1e-08
        %v1635 = vadd.f32 %v1571, 1e-08
        %v1636 = vadd.f32 %v1578, 1e-08
        %v1637 = vadd.f32 %v1585, 1e-08
        %v1638 = vadd.f32 %v1592, 1e-08
        %v1639 = vadd.f32 %v1599, 1e-08
        %v1640 = vadd.f32 %v1606, 1e-08
        %v1641 = vadd.f32 %v1613, 1e-08
        %v1642 = vadd.f32 %v1620, 1e-08
        %v1643 = vadd.f32 %v1627, 1e-08
        %v1644 = vld [vmem:[#allocation3] sm:$0xff]
        %v1645 = vld [vmem:[#allocation3 + $0x8] sm:$0xff]
        %v1646 = vld [vmem:[#allocation3 + $0x10] sm:$0xff]
        %v1647 = vld [vmem:[#allocation3 + $0x18] sm:$0xff]
        %v1648 = vld [vmem:[#allocation3 + $0x20] sm:$0xff]
        %v1649 = vld [vmem:[#allocation3 + $0x28] sm:$0xff]
        %v1650 = vld [vmem:[#allocation3 + $0x30] sm:$0xff]
        %v1651 = vld [vmem:[#allocation3 + $0x38] sm:$0xff]
        %v1652 = vld [vmem:[#allocation3 + $0x40] sm:$0xff]
        %v1653 = vld [vmem:[#allocation3 + $0x48] sm:$0xff]
        %v1654 = vld [vmem:[#allocation3 + $0x50] sm:$0xff]
        %v1655 = vld [vmem:[#allocation3 + $0x58] sm:$0xff]
        %v1656 = vld [vmem:[#allocation3 + $0x60] sm:$0xff]
        %v1657 = vld [vmem:[#allocation3 + $0x68] sm:$0xff]
        %v1658 = vld [vmem:[#allocation3 + $0x70] sm:$0xff]
        %v1659 = vld [vmem:[#allocation3 + $0x78] sm:$0xff]
        %v1660 = vrsqrt.pop %v1644
        %v1661 = vmul.f32 %v1644, %v1660
        %vm1662 = vcmp.eq.f32.partialorder %v1644, inf
        %v1663 = vsel %vm1662, %v1644, %v1661
        %vm1664 = vcmp.eq.f32.partialorder %v1644, 0.0
        %v1665 = vand.u32 %v1644, 2147483648
        %v1666 = vsel %vm1664, %v1665, %v1663
        %v1667 = vrsqrt.pop %v1645
        %v1668 = vmul.f32 %v1645, %v1667
        %vm1669 = vcmp.eq.f32.partialorder %v1645, inf
        %v1670 = vsel %vm1669, %v1645, %v1668
        %vm1671 = vcmp.eq.f32.partialorder %v1645, 0.0
        %v1672 = vand.u32 %v1645, 2147483648
        %v1673 = vsel %vm1671, %v1672, %v1670
        %v1674 = vrsqrt.pop %v1646
        %v1675 = vmul.f32 %v1646, %v1674
        %vm1676 = vcmp.eq.f32.partialorder %v1646, inf
        %v1677 = vsel %vm1676, %v1646, %v1675
        %vm1678 = vcmp.eq.f32.partialorder %v1646, 0.0
        %v1679 = vand.u32 %v1646, 2147483648
        %v1680 = vsel %vm1678, %v1679, %v1677
        %v1681 = vrsqrt.pop %v1647
        %v1682 = vmul.f32 %v1647, %v1681
        %vm1683 = vcmp.eq.f32.partialorder %v1647, inf
        %v1684 = vsel %vm1683, %v1647, %v1682
        %vm1685 = vcmp.eq.f32.partialorder %v1647, 0.0
        %v1686 = vand.u32 %v1647, 2147483648
        %v1687 = vsel %vm1685, %v1686, %v1684
        %v1688 = vrsqrt.pop %v1648
        %v1689 = vmul.f32 %v1648, %v1688
        %vm1690 = vcmp.eq.f32.partialorder %v1648, inf
        %v1691 = vsel %vm1690, %v1648, %v1689
        %vm1692 = vcmp.eq.f32.partialorder %v1648, 0.0
        %v1693 = vand.u32 %v1648, 2147483648
        %v1694 = vsel %vm1692, %v1693, %v1691
        %v1695 = vrsqrt.pop %v1649
        %v1696 = vmul.f32 %v1649, %v1695
        %vm1697 = vcmp.eq.f32.partialorder %v1649, inf
        %v1698 = vsel %vm1697, %v1649, %v1696
        %vm1699 = vcmp.eq.f32.partialorder %v1649, 0.0
        %v1700 = vand.u32 %v1649, 2147483648
        %v1701 = vsel %vm1699, %v1700, %v1698
        %v1702 = vrsqrt.pop %v1650
        %v1703 = vmul.f32 %v1650, %v1702
        %vm1704 = vcmp.eq.f32.partialorder %v1650, inf
        %v1705 = vsel %vm1704, %v1650, %v1703
        %vm1706 = vcmp.eq.f32.partialorder %v1650, 0.0
        %v1707 = vand.u32 %v1650, 2147483648
        %v1708 = vsel %vm1706, %v1707, %v1705
        %v1709 = vrsqrt.pop %v1651
        %v1710 = vmul.f32 %v1651, %v1709
        %vm1711 = vcmp.eq.f32.partialorder %v1651, inf
        %v1712 = vsel %vm1711, %v1651, %v1710
        %vm1713 = vcmp.eq.f32.partialorder %v1651, 0.0
        %v1714 = vand.u32 %v1651, 2147483648
        %v1715 = vsel %vm1713, %v1714, %v1712
        %v1716 = vrsqrt.pop %v1652
        %v1717 = vmul.f32 %v1652, %v1716
        %vm1718 = vcmp.eq.f32.partialorder %v1652, inf
        %v1719 = vsel %vm1718, %v1652, %v1717
        %vm1720 = vcmp.eq.f32.partialorder %v1652, 0.0
        %v1721 = vand.u32 %v1652, 2147483648
        %v1722 = vsel %vm1720, %v1721, %v1719
        %v1723 = vrsqrt.pop %v1653
        %v1724 = vmul.f32 %v1653, %v1723
        %vm1725 = vcmp.eq.f32.partialorder %v1653, inf
        %v1726 = vsel %vm1725, %v1653, %v1724
        %vm1727 = vcmp.eq.f32.partialorder %v1653, 0.0
        %v1728 = vand.u32 %v1653, 2147483648
        %v1729 = vsel %vm1727, %v1728, %v1726
        %v1730 = vrsqrt.pop %v1654
        %v1731 = vmul.f32 %v1654, %v1730
        %vm1732 = vcmp.eq.f32.partialorder %v1654, inf
        %v1733 = vsel %vm1732, %v1654, %v1731
        %vm1734 = vcmp.eq.f32.partialorder %v1654, 0.0
        %v1735 = vand.u32 %v1654, 2147483648
        %v1736 = vsel %vm1734, %v1735, %v1733
        %v1737 = vrsqrt.pop %v1655
        %v1738 = vmul.f32 %v1655, %v1737
        %vm1739 = vcmp.eq.f32.partialorder %v1655, inf
        %v1740 = vsel %vm1739, %v1655, %v1738
        %vm1741 = vcmp.eq.f32.partialorder %v1655, 0.0
        %v1742 = vand.u32 %v1655, 2147483648
        %v1743 = vsel %vm1741, %v1742, %v1740
        %v1744 = vrsqrt.pop %v1656
        %v1745 = vmul.f32 %v1656, %v1744
        %vm1746 = vcmp.eq.f32.partialorder %v1656, inf
        %v1747 = vsel %vm1746, %v1656, %v1745
        %vm1748 = vcmp.eq.f32.partialorder %v1656, 0.0
        %v1749 = vand.u32 %v1656, 2147483648
        %v1750 = vsel %vm1748, %v1749, %v1747
        %v1751 = vrsqrt.pop %v1657
        %v1752 = vmul.f32 %v1657, %v1751
        %vm1753 = vcmp.eq.f32.partialorder %v1657, inf
        %v1754 = vsel %vm1753, %v1657, %v1752
        %vm1755 = vcmp.eq.f32.partialorder %v1657, 0.0
        %v1756 = vand.u32 %v1657, 2147483648
        %v1757 = vsel %vm1755, %v1756, %v1754
        %v1758 = vrsqrt.pop %v1658
        %v1759 = vmul.f32 %v1658, %v1758
        %vm1760 = vcmp.eq.f32.partialorder %v1658, inf
        %v1761 = vsel %vm1760, %v1658, %v1759
        %vm1762 = vcmp.eq.f32.partialorder %v1658, 0.0
        %v1763 = vand.u32 %v1658, 2147483648
        %v1764 = vsel %vm1762, %v1763, %v1761
        %v1765 = vrsqrt.pop %v1659
        %v1766 = vmul.f32 %v1659, %v1765
        %vm1767 = vcmp.eq.f32.partialorder %v1659, inf
        %v1768 = vsel %vm1767, %v1659, %v1766
        %vm1769 = vcmp.eq.f32.partialorder %v1659, 0.0
        %v1770 = vand.u32 %v1659, 2147483648
        %v1771 = vsel %vm1769, %v1770, %v1768
        %v1772 = vadd.f32 %v1666, 1e-08
        %v1773 = vadd.f32 %v1673, 1e-08
        %v1774 = vadd.f32 %v1680, 1e-08
        %v1775 = vadd.f32 %v1687, 1e-08
        %v1776 = vadd.f32 %v1694, 1e-08
        %v1777 = vadd.f32 %v1701, 1e-08
        %v1778 = vadd.f32 %v1708, 1e-08
        %v1779 = vadd.f32 %v1715, 1e-08
        %v1780 = vadd.f32 %v1722, 1e-08
        %v1781 = vadd.f32 %v1729, 1e-08
        %v1782 = vadd.f32 %v1736, 1e-08
        %v1783 = vadd.f32 %v1743, 1e-08
        %v1784 = vadd.f32 %v1750, 1e-08
        %v1785 = vadd.f32 %v1757, 1e-08
        %v1786 = vadd.f32 %v1764, 1e-08
        %v1787 = vadd.f32 %v1771, 1e-08
        %v1788 = vadd.f32 %v1772, 10.0
        %v1789 = vadd.f32 %v1773, 10.0
        %v1790 = vadd.f32 %v1774, 10.0
        %v1791 = vadd.f32 %v1775, 10.0
        %v1792 = vadd.f32 %v1776, 10.0
        %v1793 = vadd.f32 %v1777, 10.0
        %v1794 = vadd.f32 %v1778, 10.0
        %v1795 = vadd.f32 %v1779, 10.0
        %v1796 = vadd.f32 %v1780, 10.0
        %v1797 = vadd.f32 %v1781, 10.0
        %v1798 = vadd.f32 %v1782, 10.0
        %v1799 = vadd.f32 %v1783, 10.0
        %v1800 = vadd.f32 %v1784, 10.0
        %v1801 = vadd.f32 %v1785, 10.0
        %v1802 = vadd.f32 %v1786, 10.0
        %v1803 = vadd.f32 %v1787, 10.0
        %v1804 = vmin.f32 %v1628, %v1788
        %v1805 = vmin.f32 %v1629, %v1789
        %v1806 = vmin.f32 %v1630, %v1790
        %v1807 = vmin.f32 %v1631, %v1791
        %v1808 = vmin.f32 %v1632, %v1792
        %v1809 = vmin.f32 %v1633, %v1793
        %v1810 = vmin.f32 %v1634, %v1794
        %v1811 = vmin.f32 %v1635, %v1795
        %v1812 = vmin.f32 %v1636, %v1796
        %v1813 = vmin.f32 %v1637, %v1797
        %v1814 = vmin.f32 %v1638, %v1798
        %v1815 = vmin.f32 %v1639, %v1799
        %v1816 = vmin.f32 %v1640, %v1800
        %v1817 = vmin.f32 %v1641, %v1801
        %v1818 = vmin.f32 %v1642, %v1802
        %v1819 = vmin.f32 %v1643, %v1803
        %v1820 = vld [vmem:[#allocation4] sm:$0xff]
        %v1821 = vld [vmem:[#allocation4 + $0x8] sm:$0xff]
        %v1822 = vld [vmem:[#allocation4 + $0x10] sm:$0xff]
        %v1823 = vld [vmem:[#allocation4 + $0x18] sm:$0xff]
        %v1824 = vld [vmem:[#allocation4 + $0x20] sm:$0xff]
        %v1825 = vld [vmem:[#allocation4 + $0x28] sm:$0xff]
        %v1826 = vld [vmem:[#allocation4 + $0x30] sm:$0xff]
        %v1827 = vld [vmem:[#allocation4 + $0x38] sm:$0xff]
        %v1828 = vld [vmem:[#allocation4 + $0x40] sm:$0xff]
        %v1829 = vld [vmem:[#allocation4 + $0x48] sm:$0xff]
        %v1830 = vld [vmem:[#allocation4 + $0x50] sm:$0xff]
        %v1831 = vld [vmem:[#allocation4 + $0x58] sm:$0xff]
        %v1832 = vld [vmem:[#allocation4 + $0x60] sm:$0xff]
        %v1833 = vld [vmem:[#allocation4 + $0x68] sm:$0xff]
        %v1834 = vld [vmem:[#allocation4 + $0x70] sm:$0xff]
        %v1835 = vld [vmem:[#allocation4 + $0x78] sm:$0xff]
        %v1836 = vadd.f32 %v1820, 1.0
        %v1837 = vadd.f32 %v1821, 1.0
        %v1838 = vadd.f32 %v1822, 1.0
        %v1839 = vadd.f32 %v1823, 1.0
        %v1840 = vadd.f32 %v1824, 1.0
        %v1841 = vadd.f32 %v1825, 1.0
        %v1842 = vadd.f32 %v1826, 1.0
        %v1843 = vadd.f32 %v1827, 1.0
        %v1844 = vadd.f32 %v1828, 1.0
        %v1845 = vadd.f32 %v1829, 1.0
        %v1846 = vadd.f32 %v1830, 1.0
        %v1847 = vadd.f32 %v1831, 1.0
        %v1848 = vadd.f32 %v1832, 1.0
        %v1849 = vadd.f32 %v1833, 1.0
        %v1850 = vadd.f32 %v1834, 1.0
        %v1851 = vadd.f32 %v1835, 1.0
        %v1852 = vsub.f32 %v1836, %v1804
        %v1853 = vsub.f32 %v1837, %v1805
        %v1854 = vsub.f32 %v1838, %v1806
        %v1855 = vsub.f32 %v1839, %v1807
        %v1856 = vsub.f32 %v1840, %v1808
        %v1857 = vsub.f32 %v1841, %v1809
        %v1858 = vsub.f32 %v1842, %v1810
        %v1859 = vsub.f32 %v1843, %v1811
        %v1860 = vsub.f32 %v1844, %v1812
        %v1861 = vsub.f32 %v1845, %v1813
        %v1862 = vsub.f32 %v1846, %v1814
        %v1863 = vsub.f32 %v1847, %v1815
        %v1864 = vsub.f32 %v1848, %v1816
        %v1865 = vsub.f32 %v1849, %v1817
        %v1866 = vsub.f32 %v1850, %v1818
        %v1867 = vsub.f32 %v1851, %v1819
        %v1868 = vmax.f32 %v1852, 0.0
        %v1869 = vmax.f32 %v1853, 0.0
        %v1870 = vmax.f32 %v1854, 0.0
        %v1871 = vmax.f32 %v1855, 0.0
        %v1872 = vmax.f32 %v1856, 0.0
        %v1873 = vmax.f32 %v1857, 0.0
        %v1874 = vmax.f32 %v1858, 0.0
        %v1875 = vmax.f32 %v1859, 0.0
        %v1876 = vmax.f32 %v1860, 0.0
        %v1877 = vmax.f32 %v1861, 0.0
        %v1878 = vmax.f32 %v1862, 0.0
        %v1879 = vmax.f32 %v1863, 0.0
        %v1880 = vmax.f32 %v1864, 0.0
        %v1881 = vmax.f32 %v1865, 0.0
        %v1882 = vmax.f32 %v1866, 0.0
        %v1883 = vmax.f32 %v1867, 0.0
        %vm1884 = vcmp.lt.s32.totalorder %v792, 300
        %vm1885 = vcmp.lt.s32.totalorder %v793, 300
        %vm1886 = vcmp.lt.s32.totalorder %v794, 300
        %vm1887 = vcmp.lt.s32.totalorder %v795, 300
        %vm1888 = vcmp.lt.s32.totalorder %v796, 300
        %vm1889 = vcmp.lt.s32.totalorder %v797, 300
        %vm1890 = vcmp.lt.s32.totalorder %v798, 300
        %vm1891 = vcmp.lt.s32.totalorder %v799, 300
        %vm1892 = vcmp.lt.s32.totalorder %v800, 300
        %vm1893 = vcmp.lt.s32.totalorder %v801, 300
        %vm1894 = vcmp.lt.s32.totalorder %v802, 300
        %vm1895 = vcmp.lt.s32.totalorder %v803, 300
        %vm1896 = vcmp.lt.s32.totalorder %v804, 300
        %vm1897 = vcmp.lt.s32.totalorder %v805, 300
        %vm1898 = vcmp.lt.s32.totalorder %v806, 300
        %vm1899 = vcmp.lt.s32.totalorder %v807, 300
        %v1900 = vsel %vm1884, %v1868, 0.0
        %v1901 = vsel %vm1885, %v1869, 0.0
        %v1902 = vsel %vm1886, %v1870, 0.0
        %v1903 = vsel %vm1887, %v1871, 0.0
        %v1904 = vsel %vm1888, %v1872, 0.0
        %v1905 = vsel %vm1889, %v1873, 0.0
        %v1906 = vsel %vm1890, %v1874, 0.0
        %v1907 = vsel %vm1891, %v1875, 0.0
        %v1908 = vsel %vm1892, %v1876, 0.0
        %v1909 = vsel %vm1893, %v1877, 0.0
        %v1910 = vsel %vm1894, %v1878, 0.0
        %v1911 = vsel %vm1895, %v1879, 0.0
        %v1912 = vsel %vm1896, %v1880, 0.0
        %v1913 = vsel %vm1897, %v1881, 0.0
        %v1914 = vsel %vm1898, %v1882, 0.0
        %v1915 = vsel %vm1899, %v1883, 0.0
        %vm1916 = vcmask 7168
        %1917 = vst.msk [vmem:[%s228] sm:$0xff] %vm1916, %v1900
        %1918 = vst.msk [vmem:[%s228 + $0x8] sm:$0xff] %vm1916, %v1901
        %1919 = vst.msk [vmem:[%s228 + $0x10] sm:$0xff] %vm1916, %v1902
        %1920 = vst.msk [vmem:[%s228 + $0x18] sm:$0xff] %vm1916, %v1903
        %1921 = vst.msk [vmem:[%s228 + $0x20] sm:$0xff] %vm1916, %v1904
        %1922 = vst.msk [vmem:[%s228 + $0x28] sm:$0xff] %vm1916, %v1905
        %1923 = vst.msk [vmem:[%s228 + $0x30] sm:$0xff] %vm1916, %v1906
        %1924 = vst.msk [vmem:[%s228 + $0x38] sm:$0xff] %vm1916, %v1907
        %1925 = vst.msk [vmem:[%s228 + $0x40] sm:$0xff] %vm1916, %v1908
        %1926 = vst.msk [vmem:[%s228 + $0x48] sm:$0xff] %vm1916, %v1909
        %1927 = vst.msk [vmem:[%s228 + $0x50] sm:$0xff] %vm1916, %v1910
        %1928 = vst.msk [vmem:[%s228 + $0x58] sm:$0xff] %vm1916, %v1911
        %1929 = vst.msk [vmem:[%s228 + $0x60] sm:$0xff] %vm1916, %v1912
        %1930 = vst.msk [vmem:[%s228 + $0x68] sm:$0xff] %vm1916, %v1913
        %1931 = vst.msk [vmem:[%s228 + $0x70] sm:$0xff] %vm1916, %v1914
        %1932 = vst.msk [vmem:[%s228 + $0x78] sm:$0xff] %vm1916, %v1915
      $region44: #{tpu_custom_call.1} parent=31 // pred_fallthru
        _
      %s1933 = smul.u32 16, %s18
      %p1934 = scmp.lt.s32.totalorder %s1933, 47
      %s1935 = scalar_select %p1934, %s1933, 47
      %s1936 = smul.addr %s1935, 8
      %s1937 = scalar_lea.vmem %s3, %s1936
      // Predicated region
      $region45: #{tpu_custom_call.1} parent=31 // pred_check
        %p1938 = pneg %p122
      $region46: #{tpu_custom_call.1} parent=31 // pred_check_branch
        %1940 = sbr.rel (%p1938) target = $region48
      $region47: #{tpu_custom_call.1} parent=31 // pred_region
        %s1941 = smul.u32 16, %s18
      $region48: #{tpu_custom_call.1} parent=31 // pred_fallthru
        _
    $region32: #{tpu_custom_call.1} parent=5 // pred_fallthru
      _
    %p1942 = scmp.le.s32.totalorder 2, %s9
    // Predicated region
    $region49: #{tpu_custom_call.1} parent=5 // pred_check
      %p1943 = pneg %p1942
    $region50: #{tpu_custom_call.1} parent=5 // pred_check_branch
      %1945 = sbr.rel (%p1943) target = $region52
    $region51: #{tpu_custom_call.1} parent=5 // pred_region
      %s1946 = ssub.s32 %s9, 2
      // Predicated region
      $region53: #{tpu_custom_call.1} parent=51 // pred_check
        %p1947 = pneg %p128
      $region54: #{tpu_custom_call.1} parent=51 // pred_check_branch
        %1949 = sbr.rel (%p1947) target = $region56
      $region55: #{tpu_custom_call.1} parent=51 // pred_region
        %s1950 = smul.u32 16, %s20
        %p1951 = scmp.lt.s32.totalorder %s1950, 47
        %s1952 = scalar_select %p1951, %s1950, 47
        %s1953 = smul.addr %s1952, 8
        %s1954 = scalar_lea.vmem %s3, %s1953
      $region56: #{tpu_custom_call.1} parent=51 // pred_fallthru
        _
    $region52: #{tpu_custom_call.1} parent=5 // pred_fallthru
      _
  $region6: #{tpu_custom_call.1} parent=0 // loop_footer
    %s13 = sadd.s32 1, %s9
  $region7: #{tpu_custom_call.1} parent=0 // loop_footer_branch
    %8 = sbr.rel target = $region3
  $region8: #{tpu_custom_call.1} parent=0 // loop_exit
    _

</llo_original>
